<compile_context>
chip_gen: v7x
topology: tpu7x:2x2x1
jax: 0.10.0
libtpu: 0.0.40
codegen_flags: <defaults>
</compile_context>

<pallas_src>
import jax
import jax.numpy as jnp
from jax.experimental import pallas as pl
from jax.experimental.pallas import tpu as pltpu

_H_CHUNK = 8  # one sublane-tile of the hidden layer live at a time


def _round_up(v, m):
    return ((v + m - 1) // m) * m


def _policy_fwd_kernel(x_ref, w1_ref, b1_ref, wd_ref, bd_ref, o_ref):
    # x_ref : (Din, Bt)   batch on the lane axis
    # w1_ref: (H, Din)    b1_ref: (H, 1)
    # wd_ref: (H, 1)      precomputed fc2 weight difference (2-class softmax collapse)
    # bd_ref: (1, 1)      precomputed fc2 bias difference
    # o_ref : (2, Bt)     lane-dense output block
    x_t = x_ref[...]                                    # (Din, Bt)
    din = x_t.shape[0]
    h_rows = w1_ref.shape[0]
    bt = x_t.shape[1]

    # Chunked accumulation over H: only an (8, Bt) slab of the hidden activation is
    # ever live; h*wd partial sums accumulate into d_acc, reduced over sublanes once.
    d_acc = jnp.zeros((_H_CHUNK, bt), jnp.float32)
    for r0 in range(0, h_rows, _H_CHUNK):               # static, fully unrolled
        w1c = w1_ref[r0:r0 + _H_CHUNK, :]                # (8, Din)
        b1c = b1_ref[r0:r0 + _H_CHUNK, :]                # (8, 1)
        wdc = wd_ref[r0:r0 + _H_CHUNK, :]                # (8, 1)

        # fc1 rows r0..r0+7 as Din rank-1 VPU updates (outer products); K=4 on the
        # MXU would be >97% padding plus an MRF/MRB round-trip, so stay on the VALU.
        h = w1c[:, 0:1] * x_t[0:1, :]                    # (8, Bt)
        for k in range(1, din):
            h = h + w1c[:, k:k + 1] * x_t[k:k + 1, :]
        h = jnp.maximum(h + b1c, 0.0)                    # ReLU; dropout = identity (eval)
        d_acc = d_acc + h * wdc                          # fold fc2 weight-diff in place

    # Single cross-sublane reduction (XLU slot), then sigmoid of the logit difference:
    #   softmax([l0, l1]) = [sigmoid(l0 - l1), 1 - sigmoid(l0 - l1)]
    d = jnp.sum(d_acc, axis=0, keepdims=True) + bd_ref[...]      # (1, Bt)
    p0 = pl.reciprocal(1.0 + jnp.exp(-d), approx=True)           # EUP exp + vrcp
    p0 = jnp.clip(p0, 0.0, 1.0)                                  # approx rcp can overshoot
    o_ref[...] = jnp.concatenate([p0, 1.0 - p0], axis=0).astype(o_ref.dtype)


def neural_network_forward(x, fc1_w, fc1_b, fc2_w, fc2_b, *,
                           max_block_b=1024, min_blocks=2):
    """x: (B, Din) f32 -> (B, C) softmax probabilities (eval-mode forward).

    Parameters are in PyTorch nn.Linear layout: weight (out, in), bias (out,).
    """
    B, din = x.shape
    H, din_w = fc1_w.shape
    C = fc2_w.shape[0]
    assert din_w == din
    assert C == 2, "kernel specialised for 2 actions (CartPole policy)"
    assert H % _H_CHUNK == 0

    # Adaptive lane block: big enough to amortize grid-step overhead, capped so the
    # chunked accumulation keeps vreg pressure bounded, and split into >= min_blocks
    # blocks so v7x's 2 TensorCores both get work ("parallel" axis).
    block_b = min(max_block_b, _round_up(pl.cdiv(B, min_blocks), 128))
    block_b = max(block_b, 128)
    n_blocks = pl.cdiv(B, block_b)
    b_pad = n_blocks * block_b

    # Batch on the lane axis, padded to a whole number of lane-dense blocks.
    x_t = jnp.pad(x.T, ((0, 0), (0, b_pad - B)))         # (Din, Bp)

    w1 = fc1_w                                           # (H, Din)
    b1 = fc1_b.reshape(H, 1)                             # (H, 1)
    wd = (fc2_w[0] - fc2_w[1]).reshape(H, 1)             # (H, 1) fc2 weight difference
    bd = (fc2_b[0] - fc2_b[1]).reshape(1, 1)             # (1, 1) fc2 bias difference

    out_t = pl.pallas_call(
        _policy_fwd_kernel,
        out_shape=jax.ShapeDtypeStruct((C, b_pad), jnp.float32),
        grid_spec=pltpu.PrefetchScalarGridSpec(
            num_scalar_prefetch=0,
            grid=(n_blocks,),
            in_specs=[
                pl.BlockSpec((din, block_b), lambda j: (0, j)),   # x^T batch block
                pl.BlockSpec((H, din), lambda j: (0, 0)),         # w1 (resident)
                pl.BlockSpec((H, 1), lambda j: (0, 0)),           # b1
                pl.BlockSpec((H, 1), lambda j: (0, 0)),           # wd
                pl.BlockSpec((1, 1), lambda j: (0, 0)),           # bd
            ],
            out_specs=pl.BlockSpec((C, block_b), lambda j: (0, j)),
        ),
        compiler_params=pltpu.CompilerParams(
            dimension_semantics=("parallel",)),  # shards blocks across 2 TCs on v7x
    )(x_t, w1, b1, wd, bd)

    return out_t.T[:B]                                   # (B, C)


if __name__ == "__main__":
    INPUT_SIZE, HIDDEN_SIZE, NUMB_CLASSES = 4, 128, 2    # CartPole policy net
    B = 200                                              # small batched rollout

    key = jax.random.PRNGKey(0)
    kx, k1, k2, k3, k4 = jax.random.split(key, 5)
    x = jax.random.normal(kx, (B, INPUT_SIZE), jnp.float32)

    # nn.Linear-style init, PyTorch layout: weight (out, in), bias (out,)
    lim1 = 1.0 / float(INPUT_SIZE) ** 0.5
    lim2 = 1.0 / float(HIDDEN_SIZE) ** 0.5
    fc1_w = jax.random.uniform(k1, (HIDDEN_SIZE, INPUT_SIZE), jnp.float32, -lim1, lim1)
    fc1_b = jax.random.uniform(k2, (HIDDEN_SIZE,), jnp.float32, -lim1, lim1)
    fc2_w = jax.random.uniform(k3, (NUMB_CLASSES, HIDDEN_SIZE), jnp.float32, -lim2, lim2)
    fc2_b = jax.random.uniform(k4, (NUMB_CLASSES,), jnp.float32, -lim2, lim2)

    fwd = jax.jit(neural_network_forward)
    out = jax.block_until_ready(fwd(x, fc1_w, fc1_b, fc2_w, fc2_b))

    # pure-JAX reference (matches the PyTorch eval-mode forward)
    h_ref = jnp.maximum(x @ fc1_w.T + fc1_b, 0.0)
    ref = jax.nn.softmax(h_ref @ fc2_w.T + fc2_b, axis=1)

    assert out.shape == (B, NUMB_CLASSES)
    # approx reciprocal (EUP vrcp) => tolerance ~1e-3
    assert jnp.allclose(out, ref, atol=2e-3, rtol=2e-3), \
        float(jnp.max(jnp.abs(out - ref)))
    assert jnp.allclose(jnp.sum(out, axis=1), 1.0, atol=1e-4)
    assert jnp.all(out >= 0.0) and jnp.all(out <= 1.0)
    print("KERNEL_OK")
</pallas_src>

<mosaic_0001>
module attributes {stable_mosaic.version = 11 : i64} {
  func.func @_policy_fwd_kernel(%arg0: i32, %arg1: memref<4x128xf32, #tpu.memory_space<vmem>>, %arg2: memref<128x4xf32, #tpu.memory_space<vmem>>, %arg3: memref<128x1xf32, #tpu.memory_space<vmem>>, %arg4: memref<128x1xf32, #tpu.memory_space<vmem>>, %arg5: memref<1x1xf32, #tpu.memory_space<vmem>>, %arg6: memref<2x128xf32, #tpu.memory_space<vmem>>) attributes {dimension_semantics = [#tpu.dimension_semantics<parallel>], iteration_bounds = array<i64: 2>, scalar_prefetch = 0 : i64, scratch_operands = 0 : i64, tpu.core_type = #tpu.core_type<tc>, window_params = [{transform_indices = @transform_0, window_bounds = array<i64: 4, 128>}, {pipeline_mode = #tpu.pipeline_mode<synchronous>, transform_indices = @transform_1, window_bounds = array<i64: 128, 4>}, {pipeline_mode = #tpu.pipeline_mode<synchronous>, transform_indices = @transform_2, window_bounds = array<i64: 128, 1>}, {pipeline_mode = #tpu.pipeline_mode<synchronous>, transform_indices = @transform_3, window_bounds = array<i64: 128, 1>}, {pipeline_mode = #tpu.pipeline_mode<synchronous>, transform_indices = @transform_4, window_bounds = array<i64: 1, 1>}, {transform_indices = @transform_5, window_bounds = array<i64: 2, 128>}]} {
    %c0 = arith.constant 0 : index
    %c0_0 = arith.constant 0 : index
    %0 = vector.load %arg1[%c0, %c0_0] : memref<4x128xf32, #tpu.memory_space<vmem>>, vector<4x128xf32>
    %cst = arith.constant 0.000000e+00 : f32
    %1 = vector.broadcast %cst : f32 to vector<8x128xf32>
    %c0_1 = arith.constant 0 : index
    %c0_2 = arith.constant 0 : index
    %2 = vector.load %arg2[%c0_1, %c0_2] : memref<128x4xf32, #tpu.memory_space<vmem>>, vector<8x4xf32>
    %c0_3 = arith.constant 0 : index
    %c0_4 = arith.constant 0 : index
    %3 = vector.load %arg3[%c0_3, %c0_4] : memref<128x1xf32, #tpu.memory_space<vmem>>, vector<8x1xf32>
    %c0_5 = arith.constant 0 : index
    %c0_6 = arith.constant 0 : index
    %4 = vector.load %arg4[%c0_5, %c0_6] : memref<128x1xf32, #tpu.memory_space<vmem>>, vector<8x1xf32>
    %5 = vector.extract_strided_slice %2 {offsets = [0, 0], sizes = [8, 1], strides = [1, 1]} : vector<8x4xf32> to vector<8x1xf32>
    %6 = vector.extract_strided_slice %0 {offsets = [0, 0], sizes = [1, 128], strides = [1, 1]} : vector<4x128xf32> to vector<1x128xf32>
    %7 = vector.broadcast %5 : vector<8x1xf32> to vector<8x128xf32>
    %8 = vector.broadcast %6 : vector<1x128xf32> to vector<8x128xf32>
    %9 = arith.mulf %7, %8 : vector<8x128xf32>
    %10 = vector.extract_strided_slice %2 {offsets = [0, 1], sizes = [8, 1], strides = [1, 1]} : vector<8x4xf32> to vector<8x1xf32>
    %11 = vector.extract_strided_slice %0 {offsets = [1, 0], sizes = [1, 128], strides = [1, 1]} : vector<4x128xf32> to vector<1x128xf32>
    %12 = vector.broadcast %10 : vector<8x1xf32> to vector<8x128xf32>
    %13 = vector.broadcast %11 : vector<1x128xf32> to vector<8x128xf32>
    %14 = arith.mulf %12, %13 : vector<8x128xf32>
    %15 = arith.addf %9, %14 : vector<8x128xf32>
    %16 = vector.extract_strided_slice %2 {offsets = [0, 2], sizes = [8, 1], strides = [1, 1]} : vector<8x4xf32> to vector<8x1xf32>
    %17 = vector.extract_strided_slice %0 {offsets = [2, 0], sizes = [1, 128], strides = [1, 1]} : vector<4x128xf32> to vector<1x128xf32>
    %18 = vector.broadcast %16 : vector<8x1xf32> to vector<8x128xf32>
    %19 = vector.broadcast %17 : vector<1x128xf32> to vector<8x128xf32>
    %20 = arith.mulf %18, %19 : vector<8x128xf32>
    %21 = arith.addf %15, %20 : vector<8x128xf32>
    %22 = vector.extract_strided_slice %2 {offsets = [0, 3], sizes = [8, 1], strides = [1, 1]} : vector<8x4xf32> to vector<8x1xf32>
    %23 = vector.extract_strided_slice %0 {offsets = [3, 0], sizes = [1, 128], strides = [1, 1]} : vector<4x128xf32> to vector<1x128xf32>
    %24 = vector.broadcast %22 : vector<8x1xf32> to vector<8x128xf32>
    %25 = vector.broadcast %23 : vector<1x128xf32> to vector<8x128xf32>
    %26 = arith.mulf %24, %25 : vector<8x128xf32>
    %27 = arith.addf %21, %26 : vector<8x128xf32>
    %28 = vector.broadcast %3 : vector<8x1xf32> to vector<8x128xf32>
    %29 = arith.addf %27, %28 : vector<8x128xf32>
    %cst_7 = arith.constant 0.000000e+00 : f32
    %30 = vector.broadcast %cst_7 : f32 to vector<8x128xf32>
    %31 = arith.maximumf %29, %30 : vector<8x128xf32>
    %32 = vector.broadcast %4 : vector<8x1xf32> to vector<8x128xf32>
    %33 = arith.mulf %31, %32 : vector<8x128xf32>
    %34 = arith.addf %1, %33 : vector<8x128xf32>
    %c8 = arith.constant 8 : index
    %c0_8 = arith.constant 0 : index
    %35 = vector.load %arg2[%c8, %c0_8] : memref<128x4xf32, #tpu.memory_space<vmem>>, vector<8x4xf32>
    %c8_9 = arith.constant 8 : index
    %c0_10 = arith.constant 0 : index
    %36 = vector.load %arg3[%c8_9, %c0_10] : memref<128x1xf32, #tpu.memory_space<vmem>>, vector<8x1xf32>
    %c8_11 = arith.constant 8 : index
    %c0_12 = arith.constant 0 : index
    %37 = vector.load %arg4[%c8_11, %c0_12] : memref<128x1xf32, #tpu.memory_space<vmem>>, vector<8x1xf32>
    %38 = vector.extract_strided_slice %35 {offsets = [0, 0], sizes = [8, 1], strides = [1, 1]} : vector<8x4xf32> to vector<8x1xf32>
    %39 = vector.extract_strided_slice %0 {offsets = [0, 0], sizes = [1, 128], strides = [1, 1]} : vector<4x128xf32> to vector<1x128xf32>
    %40 = vector.broadcast %38 : vector<8x1xf32> to vector<8x128xf32>
    %41 = vector.broadcast %39 : vector<1x128xf32> to vector<8x128xf32>
    %42 = arith.mulf %40, %41 : vector<8x128xf32>
    %43 = vector.extract_strided_slice %35 {offsets = [0, 1], sizes = [8, 1], strides = [1, 1]} : vector<8x4xf32> to vector<8x1xf32>
    %44 = vector.extract_strided_slice %0 {offsets = [1, 0], sizes = [1, 128], strides = [1, 1]} : vector<4x128xf32> to vector<1x128xf32>
    %45 = vector.broadcast %43 : vector<8x1xf32> to vector<8x128xf32>
    %46 = vector.broadcast %44 : vector<1x128xf32> to vector<8x128xf32>
    %47 = arith.mulf %45, %46 : vector<8x128xf32>
    %48 = arith.addf %42, %47 : vector<8x128xf32>
    %49 = vector.extract_strided_slice %35 {offsets = [0, 2], sizes = [8, 1], strides = [1, 1]} : vector<8x4xf32> to vector<8x1xf32>
    %50 = vector.extract_strided_slice %0 {offsets = [2, 0], sizes = [1, 128], strides = [1, 1]} : vector<4x128xf32> to vector<1x128xf32>
    %51 = vector.broadcast %49 : vector<8x1xf32> to vector<8x128xf32>
    %52 = vector.broadcast %50 : vector<1x128xf32> to vector<8x128xf32>
    %53 = arith.mulf %51, %52 : vector<8x128xf32>
    %54 = arith.addf %48, %53 : vector<8x128xf32>
    %55 = vector.extract_strided_slice %35 {offsets = [0, 3], sizes = [8, 1], strides = [1, 1]} : vector<8x4xf32> to vector<8x1xf32>
    %56 = vector.extract_strided_slice %0 {offsets = [3, 0], sizes = [1, 128], strides = [1, 1]} : vector<4x128xf32> to vector<1x128xf32>
    %57 = vector.broadcast %55 : vector<8x1xf32> to vector<8x128xf32>
    %58 = vector.broadcast %56 : vector<1x128xf32> to vector<8x128xf32>
    %59 = arith.mulf %57, %58 : vector<8x128xf32>
    %60 = arith.addf %54, %59 : vector<8x128xf32>
    %61 = vector.broadcast %36 : vector<8x1xf32> to vector<8x128xf32>
    %62 = arith.addf %60, %61 : vector<8x128xf32>
    %cst_13 = arith.constant 0.000000e+00 : f32
    %63 = vector.broadcast %cst_13 : f32 to vector<8x128xf32>
    %64 = arith.maximumf %62, %63 : vector<8x128xf32>
    %65 = vector.broadcast %37 : vector<8x1xf32> to vector<8x128xf32>
    %66 = arith.mulf %64, %65 : vector<8x128xf32>
    %67 = arith.addf %34, %66 : vector<8x128xf32>
    %c16 = arith.constant 16 : index
    %c0_14 = arith.constant 0 : index
    %68 = vector.load %arg2[%c16, %c0_14] : memref<128x4xf32, #tpu.memory_space<vmem>>, vector<8x4xf32>
    %c16_15 = arith.constant 16 : index
    %c0_16 = arith.constant 0 : index
    %69 = vector.load %arg3[%c16_15, %c0_16] : memref<128x1xf32, #tpu.memory_space<vmem>>, vector<8x1xf32>
    %c16_17 = arith.constant 16 : index
    %c0_18 = arith.constant 0 : index
    %70 = vector.load %arg4[%c16_17, %c0_18] : memref<128x1xf32, #tpu.memory_space<vmem>>, vector<8x1xf32>
    %71 = vector.extract_strided_slice %68 {offsets = [0, 0], sizes = [8, 1], strides = [1, 1]} : vector<8x4xf32> to vector<8x1xf32>
    %72 = vector.extract_strided_slice %0 {offsets = [0, 0], sizes = [1, 128], strides = [1, 1]} : vector<4x128xf32> to vector<1x128xf32>
    %73 = vector.broadcast %71 : vector<8x1xf32> to vector<8x128xf32>
    %74 = vector.broadcast %72 : vector<1x128xf32> to vector<8x128xf32>
    %75 = arith.mulf %73, %74 : vector<8x128xf32>
    %76 = vector.extract_strided_slice %68 {offsets = [0, 1], sizes = [8, 1], strides = [1, 1]} : vector<8x4xf32> to vector<8x1xf32>
    %77 = vector.extract_strided_slice %0 {offsets = [1, 0], sizes = [1, 128], strides = [1, 1]} : vector<4x128xf32> to vector<1x128xf32>
    %78 = vector.broadcast %76 : vector<8x1xf32> to vector<8x128xf32>
    %79 = vector.broadcast %77 : vector<1x128xf32> to vector<8x128xf32>
    %80 = arith.mulf %78, %79 : vector<8x128xf32>
    %81 = arith.addf %75, %80 : vector<8x128xf32>
    %82 = vector.extract_strided_slice %68 {offsets = [0, 2], sizes = [8, 1], strides = [1, 1]} : vector<8x4xf32> to vector<8x1xf32>
    %83 = vector.extract_strided_slice %0 {offsets = [2, 0], sizes = [1, 128], strides = [1, 1]} : vector<4x128xf32> to vector<1x128xf32>
    %84 = vector.broadcast %82 : vector<8x1xf32> to vector<8x128xf32>
    %85 = vector.broadcast %83 : vector<1x128xf32> to vector<8x128xf32>
    %86 = arith.mulf %84, %85 : vector<8x128xf32>
    %87 = arith.addf %81, %86 : vector<8x128xf32>
    %88 = vector.extract_strided_slice %68 {offsets = [0, 3], sizes = [8, 1], strides = [1, 1]} : vector<8x4xf32> to vector<8x1xf32>
    %89 = vector.extract_strided_slice %0 {offsets = [3, 0], sizes = [1, 128], strides = [1, 1]} : vector<4x128xf32> to vector<1x128xf32>
    %90 = vector.broadcast %88 : vector<8x1xf32> to vector<8x128xf32>
    %91 = vector.broadcast %89 : vector<1x128xf32> to vector<8x128xf32>
    %92 = arith.mulf %90, %91 : vector<8x128xf32>
    %93 = arith.addf %87, %92 : vector<8x128xf32>
    %94 = vector.broadcast %69 : vector<8x1xf32> to vector<8x128xf32>
    %95 = arith.addf %93, %94 : vector<8x128xf32>
    %cst_19 = arith.constant 0.000000e+00 : f32
    %96 = vector.broadcast %cst_19 : f32 to vector<8x128xf32>
    %97 = arith.maximumf %95, %96 : vector<8x128xf32>
    %98 = vector.broadcast %70 : vector<8x1xf32> to vector<8x128xf32>
    %99 = arith.mulf %97, %98 : vector<8x128xf32>
    %100 = arith.addf %67, %99 : vector<8x128xf32>
    %c24 = arith.constant 24 : index
    %c0_20 = arith.constant 0 : index
    %101 = vector.load %arg2[%c24, %c0_20] : memref<128x4xf32, #tpu.memory_space<vmem>>, vector<8x4xf32>
    %c24_21 = arith.constant 24 : index
    %c0_22 = arith.constant 0 : index
    %102 = vector.load %arg3[%c24_21, %c0_22] : memref<128x1xf32, #tpu.memory_space<vmem>>, vector<8x1xf32>
    %c24_23 = arith.constant 24 : index
    %c0_24 = arith.constant 0 : index
    %103 = vector.load %arg4[%c24_23, %c0_24] : memref<128x1xf32, #tpu.memory_space<vmem>>, vector<8x1xf32>
    %104 = vector.extract_strided_slice %101 {offsets = [0, 0], sizes = [8, 1], strides = [1, 1]} : vector<8x4xf32> to vector<8x1xf32>
    %105 = vector.extract_strided_slice %0 {offsets = [0, 0], sizes = [1, 128], strides = [1, 1]} : vector<4x128xf32> to vector<1x128xf32>
    %106 = vector.broadcast %104 : vector<8x1xf32> to vector<8x128xf32>
    %107 = vector.broadcast %105 : vector<1x128xf32> to vector<8x128xf32>
    %108 = arith.mulf %106, %107 : vector<8x128xf32>
    %109 = vector.extract_strided_slice %101 {offsets = [0, 1], sizes = [8, 1], strides = [1, 1]} : vector<8x4xf32> to vector<8x1xf32>
    %110 = vector.extract_strided_slice %0 {offsets = [1, 0], sizes = [1, 128], strides = [1, 1]} : vector<4x128xf32> to vector<1x128xf32>
    %111 = vector.broadcast %109 : vector<8x1xf32> to vector<8x128xf32>
    %112 = vector.broadcast %110 : vector<1x128xf32> to vector<8x128xf32>
    %113 = arith.mulf %111, %112 : vector<8x128xf32>
    %114 = arith.addf %108, %113 : vector<8x128xf32>
    %115 = vector.extract_strided_slice %101 {offsets = [0, 2], sizes = [8, 1], strides = [1, 1]} : vector<8x4xf32> to vector<8x1xf32>
    %116 = vector.extract_strided_slice %0 {offsets = [2, 0], sizes = [1, 128], strides = [1, 1]} : vector<4x128xf32> to vector<1x128xf32>
    %117 = vector.broadcast %115 : vector<8x1xf32> to vector<8x128xf32>
    %118 = vector.broadcast %116 : vector<1x128xf32> to vector<8x128xf32>
    %119 = arith.mulf %117, %118 : vector<8x128xf32>
    %120 = arith.addf %114, %119 : vector<8x128xf32>
    %121 = vector.extract_strided_slice %101 {offsets = [0, 3], sizes = [8, 1], strides = [1, 1]} : vector<8x4xf32> to vector<8x1xf32>
    %122 = vector.extract_strided_slice %0 {offsets = [3, 0], sizes = [1, 128], strides = [1, 1]} : vector<4x128xf32> to vector<1x128xf32>
    %123 = vector.broadcast %121 : vector<8x1xf32> to vector<8x128xf32>
    %124 = vector.broadcast %122 : vector<1x128xf32> to vector<8x128xf32>
    %125 = arith.mulf %123, %124 : vector<8x128xf32>
    %126 = arith.addf %120, %125 : vector<8x128xf32>
    %127 = vector.broadcast %102 : vector<8x1xf32> to vector<8x128xf32>
    %128 = arith.addf %126, %127 : vector<8x128xf32>
    %cst_25 = arith.constant 0.000000e+00 : f32
    %129 = vector.broadcast %cst_25 : f32 to vector<8x128xf32>
    %130 = arith.maximumf %128, %129 : vector<8x128xf32>
    %131 = vector.broadcast %103 : vector<8x1xf32> to vector<8x128xf32>
    %132 = arith.mulf %130, %131 : vector<8x128xf32>
    %133 = arith.addf %100, %132 : vector<8x128xf32>
    %c32 = arith.constant 32 : index
    %c0_26 = arith.constant 0 : index
    %134 = vector.load %arg2[%c32, %c0_26] : memref<128x4xf32, #tpu.memory_space<vmem>>, vector<8x4xf32>
    %c32_27 = arith.constant 32 : index
    %c0_28 = arith.constant 0 : index
    %135 = vector.load %arg3[%c32_27, %c0_28] : memref<128x1xf32, #tpu.memory_space<vmem>>, vector<8x1xf32>
    %c32_29 = arith.constant 32 : index
    %c0_30 = arith.constant 0 : index
    %136 = vector.load %arg4[%c32_29, %c0_30] : memref<128x1xf32, #tpu.memory_space<vmem>>, vector<8x1xf32>
    %137 = vector.extract_strided_slice %134 {offsets = [0, 0], sizes = [8, 1], strides = [1, 1]} : vector<8x4xf32> to vector<8x1xf32>
    %138 = vector.extract_strided_slice %0 {offsets = [0, 0], sizes = [1, 128], strides = [1, 1]} : vector<4x128xf32> to vector<1x128xf32>
    %139 = vector.broadcast %137 : vector<8x1xf32> to vector<8x128xf32>
    %140 = vector.broadcast %138 : vector<1x128xf32> to vector<8x128xf32>
    %141 = arith.mulf %139, %140 : vector<8x128xf32>
    %142 = vector.extract_strided_slice %134 {offsets = [0, 1], sizes = [8, 1], strides = [1, 1]} : vector<8x4xf32> to vector<8x1xf32>
    %143 = vector.extract_strided_slice %0 {offsets = [1, 0], sizes = [1, 128], strides = [1, 1]} : vector<4x128xf32> to vector<1x128xf32>
    %144 = vector.broadcast %142 : vector<8x1xf32> to vector<8x128xf32>
    %145 = vector.broadcast %143 : vector<1x128xf32> to vector<8x128xf32>
    %146 = arith.mulf %144, %145 : vector<8x128xf32>
    %147 = arith.addf %141, %146 : vector<8x128xf32>
    %148 = vector.extract_strided_slice %134 {offsets = [0, 2], sizes = [8, 1], strides = [1, 1]} : vector<8x4xf32> to vector<8x1xf32>
    %149 = vector.extract_strided_slice %0 {offsets = [2, 0], sizes = [1, 128], strides = [1, 1]} : vector<4x128xf32> to vector<1x128xf32>
    %150 = vector.broadcast %148 : vector<8x1xf32> to vector<8x128xf32>
    %151 = vector.broadcast %149 : vector<1x128xf32> to vector<8x128xf32>
    %152 = arith.mulf %150, %151 : vector<8x128xf32>
    %153 = arith.addf %147, %152 : vector<8x128xf32>
    %154 = vector.extract_strided_slice %134 {offsets = [0, 3], sizes = [8, 1], strides = [1, 1]} : vector<8x4xf32> to vector<8x1xf32>
    %155 = vector.extract_strided_slice %0 {offsets = [3, 0], sizes = [1, 128], strides = [1, 1]} : vector<4x128xf32> to vector<1x128xf32>
    %156 = vector.broadcast %154 : vector<8x1xf32> to vector<8x128xf32>
    %157 = vector.broadcast %155 : vector<1x128xf32> to vector<8x128xf32>
    %158 = arith.mulf %156, %157 : vector<8x128xf32>
    %159 = arith.addf %153, %158 : vector<8x128xf32>
    %160 = vector.broadcast %135 : vector<8x1xf32> to vector<8x128xf32>
    %161 = arith.addf %159, %160 : vector<8x128xf32>
    %cst_31 = arith.constant 0.000000e+00 : f32
    %162 = vector.broadcast %cst_31 : f32 to vector<8x128xf32>
    %163 = arith.maximumf %161, %162 : vector<8x128xf32>
    %164 = vector.broadcast %136 : vector<8x1xf32> to vector<8x128xf32>
    %165 = arith.mulf %163, %164 : vector<8x128xf32>
    %166 = arith.addf %133, %165 : vector<8x128xf32>
    %c40 = arith.constant 40 : index
    %c0_32 = arith.constant 0 : index
    %167 = vector.load %arg2[%c40, %c0_32] : memref<128x4xf32, #tpu.memory_space<vmem>>, vector<8x4xf32>
    %c40_33 = arith.constant 40 : index
    %c0_34 = arith.constant 0 : index
    %168 = vector.load %arg3[%c40_33, %c0_34] : memref<128x1xf32, #tpu.memory_space<vmem>>, vector<8x1xf32>
    %c40_35 = arith.constant 40 : index
    %c0_36 = arith.constant 0 : index
    %169 = vector.load %arg4[%c40_35, %c0_36] : memref<128x1xf32, #tpu.memory_space<vmem>>, vector<8x1xf32>
    %170 = vector.extract_strided_slice %167 {offsets = [0, 0], sizes = [8, 1], strides = [1, 1]} : vector<8x4xf32> to vector<8x1xf32>
    %171 = vector.extract_strided_slice %0 {offsets = [0, 0], sizes = [1, 128], strides = [1, 1]} : vector<4x128xf32> to vector<1x128xf32>
    %172 = vector.broadcast %170 : vector<8x1xf32> to vector<8x128xf32>
    %173 = vector.broadcast %171 : vector<1x128xf32> to vector<8x128xf32>
    %174 = arith.mulf %172, %173 : vector<8x128xf32>
    %175 = vector.extract_strided_slice %167 {offsets = [0, 1], sizes = [8, 1], strides = [1, 1]} : vector<8x4xf32> to vector<8x1xf32>
    %176 = vector.extract_strided_slice %0 {offsets = [1, 0], sizes = [1, 128], strides = [1, 1]} : vector<4x128xf32> to vector<1x128xf32>
    %177 = vector.broadcast %175 : vector<8x1xf32> to vector<8x128xf32>
    %178 = vector.broadcast %176 : vector<1x128xf32> to vector<8x128xf32>
    %179 = arith.mulf %177, %178 : vector<8x128xf32>
    %180 = arith.addf %174, %179 : vector<8x128xf32>
    %181 = vector.extract_strided_slice %167 {offsets = [0, 2], sizes = [8, 1], strides = [1, 1]} : vector<8x4xf32> to vector<8x1xf32>
    %182 = vector.extract_strided_slice %0 {offsets = [2, 0], sizes = [1, 128], strides = [1, 1]} : vector<4x128xf32> to vector<1x128xf32>
    %183 = vector.broadcast %181 : vector<8x1xf32> to vector<8x128xf32>
    %184 = vector.broadcast %182 : vector<1x128xf32> to vector<8x128xf32>
    %185 = arith.mulf %183, %184 : vector<8x128xf32>
    %186 = arith.addf %180, %185 : vector<8x128xf32>
    %187 = vector.extract_strided_slice %167 {offsets = [0, 3], sizes = [8, 1], strides = [1, 1]} : vector<8x4xf32> to vector<8x1xf32>
    %188 = vector.extract_strided_slice %0 {offsets = [3, 0], sizes = [1, 128], strides = [1, 1]} : vector<4x128xf32> to vector<1x128xf32>
    %189 = vector.broadcast %187 : vector<8x1xf32> to vector<8x128xf32>
    %190 = vector.broadcast %188 : vector<1x128xf32> to vector<8x128xf32>
    %191 = arith.mulf %189, %190 : vector<8x128xf32>
    %192 = arith.addf %186, %191 : vector<8x128xf32>
    %193 = vector.broadcast %168 : vector<8x1xf32> to vector<8x128xf32>
    %194 = arith.addf %192, %193 : vector<8x128xf32>
    %cst_37 = arith.constant 0.000000e+00 : f32
    %195 = vector.broadcast %cst_37 : f32 to vector<8x128xf32>
    %196 = arith.maximumf %194, %195 : vector<8x128xf32>
    %197 = vector.broadcast %169 : vector<8x1xf32> to vector<8x128xf32>
    %198 = arith.mulf %196, %197 : vector<8x128xf32>
    %199 = arith.addf %166, %198 : vector<8x128xf32>
    %c48 = arith.constant 48 : index
    %c0_38 = arith.constant 0 : index
    %200 = vector.load %arg2[%c48, %c0_38] : memref<128x4xf32, #tpu.memory_space<vmem>>, vector<8x4xf32>
    %c48_39 = arith.constant 48 : index
    %c0_40 = arith.constant 0 : index
    %201 = vector.load %arg3[%c48_39, %c0_40] : memref<128x1xf32, #tpu.memory_space<vmem>>, vector<8x1xf32>
    %c48_41 = arith.constant 48 : index
    %c0_42 = arith.constant 0 : index
    %202 = vector.load %arg4[%c48_41, %c0_42] : memref<128x1xf32, #tpu.memory_space<vmem>>, vector<8x1xf32>
    %203 = vector.extract_strided_slice %200 {offsets = [0, 0], sizes = [8, 1], strides = [1, 1]} : vector<8x4xf32> to vector<8x1xf32>
    %204 = vector.extract_strided_slice %0 {offsets = [0, 0], sizes = [1, 128], strides = [1, 1]} : vector<4x128xf32> to vector<1x128xf32>
    %205 = vector.broadcast %203 : vector<8x1xf32> to vector<8x128xf32>
    %206 = vector.broadcast %204 : vector<1x128xf32> to vector<8x128xf32>
    %207 = arith.mulf %205, %206 : vector<8x128xf32>
    %208 = vector.extract_strided_slice %200 {offsets = [0, 1], sizes = [8, 1], strides = [1, 1]} : vector<8x4xf32> to vector<8x1xf32>
    %209 = vector.extract_strided_slice %0 {offsets = [1, 0], sizes = [1, 128], strides = [1, 1]} : vector<4x128xf32> to vector<1x128xf32>
    %210 = vector.broadcast %208 : vector<8x1xf32> to vector<8x128xf32>
    %211 = vector.broadcast %209 : vector<1x128xf32> to vector<8x128xf32>
    %212 = arith.mulf %210, %211 : vector<8x128xf32>
    %213 = arith.addf %207, %212 : vector<8x128xf32>
    %214 = vector.extract_strided_slice %200 {offsets = [0, 2], sizes = [8, 1], strides = [1, 1]} : vector<8x4xf32> to vector<8x1xf32>
    %215 = vector.extract_strided_slice %0 {offsets = [2, 0], sizes = [1, 128], strides = [1, 1]} : vector<4x128xf32> to vector<1x128xf32>
    %216 = vector.broadcast %214 : vector<8x1xf32> to vector<8x128xf32>
    %217 = vector.broadcast %215 : vector<1x128xf32> to vector<8x128xf32>
    %218 = arith.mulf %216, %217 : vector<8x128xf32>
    %219 = arith.addf %213, %218 : vector<8x128xf32>
    %220 = vector.extract_strided_slice %200 {offsets = [0, 3], sizes = [8, 1], strides = [1, 1]} : vector<8x4xf32> to vector<8x1xf32>
    %221 = vector.extract_strided_slice %0 {offsets = [3, 0], sizes = [1, 128], strides = [1, 1]} : vector<4x128xf32> to vector<1x128xf32>
    %222 = vector.broadcast %220 : vector<8x1xf32> to vector<8x128xf32>
    %223 = vector.broadcast %221 : vector<1x128xf32> to vector<8x128xf32>
    %224 = arith.mulf %222, %223 : vector<8x128xf32>
    %225 = arith.addf %219, %224 : vector<8x128xf32>
    %226 = vector.broadcast %201 : vector<8x1xf32> to vector<8x128xf32>
    %227 = arith.addf %225, %226 : vector<8x128xf32>
    %cst_43 = arith.constant 0.000000e+00 : f32
    %228 = vector.broadcast %cst_43 : f32 to vector<8x128xf32>
    %229 = arith.maximumf %227, %228 : vector<8x128xf32>
    %230 = vector.broadcast %202 : vector<8x1xf32> to vector<8x128xf32>
    %231 = arith.mulf %229, %230 : vector<8x128xf32>
    %232 = arith.addf %199, %231 : vector<8x128xf32>
    %c56 = arith.constant 56 : index
    %c0_44 = arith.constant 0 : index
    %233 = vector.load %arg2[%c56, %c0_44] : memref<128x4xf32, #tpu.memory_space<vmem>>, vector<8x4xf32>
    %c56_45 = arith.constant 56 : index
    %c0_46 = arith.constant 0 : index
    %234 = vector.load %arg3[%c56_45, %c0_46] : memref<128x1xf32, #tpu.memory_space<vmem>>, vector<8x1xf32>
    %c56_47 = arith.constant 56 : index
    %c0_48 = arith.constant 0 : index
    %235 = vector.load %arg4[%c56_47, %c0_48] : memref<128x1xf32, #tpu.memory_space<vmem>>, vector<8x1xf32>
    %236 = vector.extract_strided_slice %233 {offsets = [0, 0], sizes = [8, 1], strides = [1, 1]} : vector<8x4xf32> to vector<8x1xf32>
    %237 = vector.extract_strided_slice %0 {offsets = [0, 0], sizes = [1, 128], strides = [1, 1]} : vector<4x128xf32> to vector<1x128xf32>
    %238 = vector.broadcast %236 : vector<8x1xf32> to vector<8x128xf32>
    %239 = vector.broadcast %237 : vector<1x128xf32> to vector<8x128xf32>
    %240 = arith.mulf %238, %239 : vector<8x128xf32>
    %241 = vector.extract_strided_slice %233 {offsets = [0, 1], sizes = [8, 1], strides = [1, 1]} : vector<8x4xf32> to vector<8x1xf32>
    %242 = vector.extract_strided_slice %0 {offsets = [1, 0], sizes = [1, 128], strides = [1, 1]} : vector<4x128xf32> to vector<1x128xf32>
    %243 = vector.broadcast %241 : vector<8x1xf32> to vector<8x128xf32>
    %244 = vector.broadcast %242 : vector<1x128xf32> to vector<8x128xf32>
    %245 = arith.mulf %243, %244 : vector<8x128xf32>
    %246 = arith.addf %240, %245 : vector<8x128xf32>
    %247 = vector.extract_strided_slice %233 {offsets = [0, 2], sizes = [8, 1], strides = [1, 1]} : vector<8x4xf32> to vector<8x1xf32>
    %248 = vector.extract_strided_slice %0 {offsets = [2, 0], sizes = [1, 128], strides = [1, 1]} : vector<4x128xf32> to vector<1x128xf32>
    %249 = vector.broadcast %247 : vector<8x1xf32> to vector<8x128xf32>
    %250 = vector.broadcast %248 : vector<1x128xf32> to vector<8x128xf32>
    %251 = arith.mulf %249, %250 : vector<8x128xf32>
    %252 = arith.addf %246, %251 : vector<8x128xf32>
    %253 = vector.extract_strided_slice %233 {offsets = [0, 3], sizes = [8, 1], strides = [1, 1]} : vector<8x4xf32> to vector<8x1xf32>
    %254 = vector.extract_strided_slice %0 {offsets = [3, 0], sizes = [1, 128], strides = [1, 1]} : vector<4x128xf32> to vector<1x128xf32>
    %255 = vector.broadcast %253 : vector<8x1xf32> to vector<8x128xf32>
    %256 = vector.broadcast %254 : vector<1x128xf32> to vector<8x128xf32>
    %257 = arith.mulf %255, %256 : vector<8x128xf32>
    %258 = arith.addf %252, %257 : vector<8x128xf32>
    %259 = vector.broadcast %234 : vector<8x1xf32> to vector<8x128xf32>
    %260 = arith.addf %258, %259 : vector<8x128xf32>
    %cst_49 = arith.constant 0.000000e+00 : f32
    %261 = vector.broadcast %cst_49 : f32 to vector<8x128xf32>
    %262 = arith.maximumf %260, %261 : vector<8x128xf32>
    %263 = vector.broadcast %235 : vector<8x1xf32> to vector<8x128xf32>
    %264 = arith.mulf %262, %263 : vector<8x128xf32>
    %265 = arith.addf %232, %264 : vector<8x128xf32>
    %c64 = arith.constant 64 : index
    %c0_50 = arith.constant 0 : index
    %266 = vector.load %arg2[%c64, %c0_50] : memref<128x4xf32, #tpu.memory_space<vmem>>, vector<8x4xf32>
    %c64_51 = arith.constant 64 : index
    %c0_52 = arith.constant 0 : index
    %267 = vector.load %arg3[%c64_51, %c0_52] : memref<128x1xf32, #tpu.memory_space<vmem>>, vector<8x1xf32>
    %c64_53 = arith.constant 64 : index
    %c0_54 = arith.constant 0 : index
    %268 = vector.load %arg4[%c64_53, %c0_54] : memref<128x1xf32, #tpu.memory_space<vmem>>, vector<8x1xf32>
    %269 = vector.extract_strided_slice %266 {offsets = [0, 0], sizes = [8, 1], strides = [1, 1]} : vector<8x4xf32> to vector<8x1xf32>
    %270 = vector.extract_strided_slice %0 {offsets = [0, 0], sizes = [1, 128], strides = [1, 1]} : vector<4x128xf32> to vector<1x128xf32>
    %271 = vector.broadcast %269 : vector<8x1xf32> to vector<8x128xf32>
    %272 = vector.broadcast %270 : vector<1x128xf32> to vector<8x128xf32>
    %273 = arith.mulf %271, %272 : vector<8x128xf32>
    %274 = vector.extract_strided_slice %266 {offsets = [0, 1], sizes = [8, 1], strides = [1, 1]} : vector<8x4xf32> to vector<8x1xf32>
    %275 = vector.extract_strided_slice %0 {offsets = [1, 0], sizes = [1, 128], strides = [1, 1]} : vector<4x128xf32> to vector<1x128xf32>
    %276 = vector.broadcast %274 : vector<8x1xf32> to vector<8x128xf32>
    %277 = vector.broadcast %275 : vector<1x128xf32> to vector<8x128xf32>
    %278 = arith.mulf %276, %277 : vector<8x128xf32>
    %279 = arith.addf %273, %278 : vector<8x128xf32>
    %280 = vector.extract_strided_slice %266 {offsets = [0, 2], sizes = [8, 1], strides = [1, 1]} : vector<8x4xf32> to vector<8x1xf32>
    %281 = vector.extract_strided_slice %0 {offsets = [2, 0], sizes = [1, 128], strides = [1, 1]} : vector<4x128xf32> to vector<1x128xf32>
    %282 = vector.broadcast %280 : vector<8x1xf32> to vector<8x128xf32>
    %283 = vector.broadcast %281 : vector<1x128xf32> to vector<8x128xf32>
    %284 = arith.mulf %282, %283 : vector<8x128xf32>
    %285 = arith.addf %279, %284 : vector<8x128xf32>
    %286 = vector.extract_strided_slice %266 {offsets = [0, 3], sizes = [8, 1], strides = [1, 1]} : vector<8x4xf32> to vector<8x1xf32>
    %287 = vector.extract_strided_slice %0 {offsets = [3, 0], sizes = [1, 128], strides = [1, 1]} : vector<4x128xf32> to vector<1x128xf32>
    %288 = vector.broadcast %286 : vector<8x1xf32> to vector<8x128xf32>
    %289 = vector.broadcast %287 : vector<1x128xf32> to vector<8x128xf32>
    %290 = arith.mulf %288, %289 : vector<8x128xf32>
    %291 = arith.addf %285, %290 : vector<8x128xf32>
    %292 = vector.broadcast %267 : vector<8x1xf32> to vector<8x128xf32>
    %293 = arith.addf %291, %292 : vector<8x128xf32>
    %cst_55 = arith.constant 0.000000e+00 : f32
    %294 = vector.broadcast %cst_55 : f32 to vector<8x128xf32>
    %295 = arith.maximumf %293, %294 : vector<8x128xf32>
    %296 = vector.broadcast %268 : vector<8x1xf32> to vector<8x128xf32>
    %297 = arith.mulf %295, %296 : vector<8x128xf32>
    %298 = arith.addf %265, %297 : vector<8x128xf32>
    %c72 = arith.constant 72 : index
    %c0_56 = arith.constant 0 : index
    %299 = vector.load %arg2[%c72, %c0_56] : memref<128x4xf32, #tpu.memory_space<vmem>>, vector<8x4xf32>
    %c72_57 = arith.constant 72 : index
    %c0_58 = arith.constant 0 : index
    %300 = vector.load %arg3[%c72_57, %c0_58] : memref<128x1xf32, #tpu.memory_space<vmem>>, vector<8x1xf32>
    %c72_59 = arith.constant 72 : index
    %c0_60 = arith.constant 0 : index
    %301 = vector.load %arg4[%c72_59, %c0_60] : memref<128x1xf32, #tpu.memory_space<vmem>>, vector<8x1xf32>
    %302 = vector.extract_strided_slice %299 {offsets = [0, 0], sizes = [8, 1], strides = [1, 1]} : vector<8x4xf32> to vector<8x1xf32>
    %303 = vector.extract_strided_slice %0 {offsets = [0, 0], sizes = [1, 128], strides = [1, 1]} : vector<4x128xf32> to vector<1x128xf32>
    %304 = vector.broadcast %302 : vector<8x1xf32> to vector<8x128xf32>
    %305 = vector.broadcast %303 : vector<1x128xf32> to vector<8x128xf32>
    %306 = arith.mulf %304, %305 : vector<8x128xf32>
    %307 = vector.extract_strided_slice %299 {offsets = [0, 1], sizes = [8, 1], strides = [1, 1]} : vector<8x4xf32> to vector<8x1xf32>
    %308 = vector.extract_strided_slice %0 {offsets = [1, 0], sizes = [1, 128], strides = [1, 1]} : vector<4x128xf32> to vector<1x128xf32>
    %309 = vector.broadcast %307 : vector<8x1xf32> to vector<8x128xf32>
    %310 = vector.broadcast %308 : vector<1x128xf32> to vector<8x128xf32>
    %311 = arith.mulf %309, %310 : vector<8x128xf32>
    %312 = arith.addf %306, %311 : vector<8x128xf32>
    %313 = vector.extract_strided_slice %299 {offsets = [0, 2], sizes = [8, 1], strides = [1, 1]} : vector<8x4xf32> to vector<8x1xf32>
    %314 = vector.extract_strided_slice %0 {offsets = [2, 0], sizes = [1, 128], strides = [1, 1]} : vector<4x128xf32> to vector<1x128xf32>
    %315 = vector.broadcast %313 : vector<8x1xf32> to vector<8x128xf32>
    %316 = vector.broadcast %314 : vector<1x128xf32> to vector<8x128xf32>
    %317 = arith.mulf %315, %316 : vector<8x128xf32>
    %318 = arith.addf %312, %317 : vector<8x128xf32>
    %319 = vector.extract_strided_slice %299 {offsets = [0, 3], sizes = [8, 1], strides = [1, 1]} : vector<8x4xf32> to vector<8x1xf32>
    %320 = vector.extract_strided_slice %0 {offsets = [3, 0], sizes = [1, 128], strides = [1, 1]} : vector<4x128xf32> to vector<1x128xf32>
    %321 = vector.broadcast %319 : vector<8x1xf32> to vector<8x128xf32>
    %322 = vector.broadcast %320 : vector<1x128xf32> to vector<8x128xf32>
    %323 = arith.mulf %321, %322 : vector<8x128xf32>
    %324 = arith.addf %318, %323 : vector<8x128xf32>
    %325 = vector.broadcast %300 : vector<8x1xf32> to vector<8x128xf32>
    %326 = arith.addf %324, %325 : vector<8x128xf32>
    %cst_61 = arith.constant 0.000000e+00 : f32
    %327 = vector.broadcast %cst_61 : f32 to vector<8x128xf32>
    %328 = arith.maximumf %326, %327 : vector<8x128xf32>
    %329 = vector.broadcast %301 : vector<8x1xf32> to vector<8x128xf32>
    %330 = arith.mulf %328, %329 : vector<8x128xf32>
    %331 = arith.addf %298, %330 : vector<8x128xf32>
    %c80 = arith.constant 80 : index
    %c0_62 = arith.constant 0 : index
    %332 = vector.load %arg2[%c80, %c0_62] : memref<128x4xf32, #tpu.memory_space<vmem>>, vector<8x4xf32>
    %c80_63 = arith.constant 80 : index
    %c0_64 = arith.constant 0 : index
    %333 = vector.load %arg3[%c80_63, %c0_64] : memref<128x1xf32, #tpu.memory_space<vmem>>, vector<8x1xf32>
    %c80_65 = arith.constant 80 : index
    %c0_66 = arith.constant 0 : index
    %334 = vector.load %arg4[%c80_65, %c0_66] : memref<128x1xf32, #tpu.memory_space<vmem>>, vector<8x1xf32>
    %335 = vector.extract_strided_slice %332 {offsets = [0, 0], sizes = [8, 1], strides = [1, 1]} : vector<8x4xf32> to vector<8x1xf32>
    %336 = vector.extract_strided_slice %0 {offsets = [0, 0], sizes = [1, 128], strides = [1, 1]} : vector<4x128xf32> to vector<1x128xf32>
    %337 = vector.broadcast %335 : vector<8x1xf32> to vector<8x128xf32>
    %338 = vector.broadcast %336 : vector<1x128xf32> to vector<8x128xf32>
    %339 = arith.mulf %337, %338 : vector<8x128xf32>
    %340 = vector.extract_strided_slice %332 {offsets = [0, 1], sizes = [8, 1], strides = [1, 1]} : vector<8x4xf32> to vector<8x1xf32>
    %341 = vector.extract_strided_slice %0 {offsets = [1, 0], sizes = [1, 128], strides = [1, 1]} : vector<4x128xf32> to vector<1x128xf32>
    %342 = vector.broadcast %340 : vector<8x1xf32> to vector<8x128xf32>
    %343 = vector.broadcast %341 : vector<1x128xf32> to vector<8x128xf32>
    %344 = arith.mulf %342, %343 : vector<8x128xf32>
    %345 = arith.addf %339, %344 : vector<8x128xf32>
    %346 = vector.extract_strided_slice %332 {offsets = [0, 2], sizes = [8, 1], strides = [1, 1]} : vector<8x4xf32> to vector<8x1xf32>
    %347 = vector.extract_strided_slice %0 {offsets = [2, 0], sizes = [1, 128], strides = [1, 1]} : vector<4x128xf32> to vector<1x128xf32>
    %348 = vector.broadcast %346 : vector<8x1xf32> to vector<8x128xf32>
    %349 = vector.broadcast %347 : vector<1x128xf32> to vector<8x128xf32>
    %350 = arith.mulf %348, %349 : vector<8x128xf32>
    %351 = arith.addf %345, %350 : vector<8x128xf32>
    %352 = vector.extract_strided_slice %332 {offsets = [0, 3], sizes = [8, 1], strides = [1, 1]} : vector<8x4xf32> to vector<8x1xf32>
    %353 = vector.extract_strided_slice %0 {offsets = [3, 0], sizes = [1, 128], strides = [1, 1]} : vector<4x128xf32> to vector<1x128xf32>
    %354 = vector.broadcast %352 : vector<8x1xf32> to vector<8x128xf32>
    %355 = vector.broadcast %353 : vector<1x128xf32> to vector<8x128xf32>
    %356 = arith.mulf %354, %355 : vector<8x128xf32>
    %357 = arith.addf %351, %356 : vector<8x128xf32>
    %358 = vector.broadcast %333 : vector<8x1xf32> to vector<8x128xf32>
    %359 = arith.addf %357, %358 : vector<8x128xf32>
    %cst_67 = arith.constant 0.000000e+00 : f32
    %360 = vector.broadcast %cst_67 : f32 to vector<8x128xf32>
    %361 = arith.maximumf %359, %360 : vector<8x128xf32>
    %362 = vector.broadcast %334 : vector<8x1xf32> to vector<8x128xf32>
    %363 = arith.mulf %361, %362 : vector<8x128xf32>
    %364 = arith.addf %331, %363 : vector<8x128xf32>
    %c88 = arith.constant 88 : index
    %c0_68 = arith.constant 0 : index
    %365 = vector.load %arg2[%c88, %c0_68] : memref<128x4xf32, #tpu.memory_space<vmem>>, vector<8x4xf32>
    %c88_69 = arith.constant 88 : index
    %c0_70 = arith.constant 0 : index
    %366 = vector.load %arg3[%c88_69, %c0_70] : memref<128x1xf32, #tpu.memory_space<vmem>>, vector<8x1xf32>
    %c88_71 = arith.constant 88 : index
    %c0_72 = arith.constant 0 : index
    %367 = vector.load %arg4[%c88_71, %c0_72] : memref<128x1xf32, #tpu.memory_space<vmem>>, vector<8x1xf32>
    %368 = vector.extract_strided_slice %365 {offsets = [0, 0], sizes = [8, 1], strides = [1, 1]} : vector<8x4xf32> to vector<8x1xf32>
    %369 = vector.extract_strided_slice %0 {offsets = [0, 0], sizes = [1, 128], strides = [1, 1]} : vector<4x128xf32> to vector<1x128xf32>
    %370 = vector.broadcast %368 : vector<8x1xf32> to vector<8x128xf32>
    %371 = vector.broadcast %369 : vector<1x128xf32> to vector<8x128xf32>
    %372 = arith.mulf %370, %371 : vector<8x128xf32>
    %373 = vector.extract_strided_slice %365 {offsets = [0, 1], sizes = [8, 1], strides = [1, 1]} : vector<8x4xf32> to vector<8x1xf32>
    %374 = vector.extract_strided_slice %0 {offsets = [1, 0], sizes = [1, 128], strides = [1, 1]} : vector<4x128xf32> to vector<1x128xf32>
    %375 = vector.broadcast %373 : vector<8x1xf32> to vector<8x128xf32>
    %376 = vector.broadcast %374 : vector<1x128xf32> to vector<8x128xf32>
    %377 = arith.mulf %375, %376 : vector<8x128xf32>
    %378 = arith.addf %372, %377 : vector<8x128xf32>
    %379 = vector.extract_strided_slice %365 {offsets = [0, 2], sizes = [8, 1], strides = [1, 1]} : vector<8x4xf32> to vector<8x1xf32>
    %380 = vector.extract_strided_slice %0 {offsets = [2, 0], sizes = [1, 128], strides = [1, 1]} : vector<4x128xf32> to vector<1x128xf32>
    %381 = vector.broadcast %379 : vector<8x1xf32> to vector<8x128xf32>
    %382 = vector.broadcast %380 : vector<1x128xf32> to vector<8x128xf32>
    %383 = arith.mulf %381, %382 : vector<8x128xf32>
    %384 = arith.addf %378, %383 : vector<8x128xf32>
    %385 = vector.extract_strided_slice %365 {offsets = [0, 3], sizes = [8, 1], strides = [1, 1]} : vector<8x4xf32> to vector<8x1xf32>
    %386 = vector.extract_strided_slice %0 {offsets = [3, 0], sizes = [1, 128], strides = [1, 1]} : vector<4x128xf32> to vector<1x128xf32>
    %387 = vector.broadcast %385 : vector<8x1xf32> to vector<8x128xf32>
    %388 = vector.broadcast %386 : vector<1x128xf32> to vector<8x128xf32>
    %389 = arith.mulf %387, %388 : vector<8x128xf32>
    %390 = arith.addf %384, %389 : vector<8x128xf32>
    %391 = vector.broadcast %366 : vector<8x1xf32> to vector<8x128xf32>
    %392 = arith.addf %390, %391 : vector<8x128xf32>
    %cst_73 = arith.constant 0.000000e+00 : f32
    %393 = vector.broadcast %cst_73 : f32 to vector<8x128xf32>
    %394 = arith.maximumf %392, %393 : vector<8x128xf32>
    %395 = vector.broadcast %367 : vector<8x1xf32> to vector<8x128xf32>
    %396 = arith.mulf %394, %395 : vector<8x128xf32>
    %397 = arith.addf %364, %396 : vector<8x128xf32>
    %c96 = arith.constant 96 : index
    %c0_74 = arith.constant 0 : index
    %398 = vector.load %arg2[%c96, %c0_74] : memref<128x4xf32, #tpu.memory_space<vmem>>, vector<8x4xf32>
    %c96_75 = arith.constant 96 : index
    %c0_76 = arith.constant 0 : index
    %399 = vector.load %arg3[%c96_75, %c0_76] : memref<128x1xf32, #tpu.memory_space<vmem>>, vector<8x1xf32>
    %c96_77 = arith.constant 96 : index
    %c0_78 = arith.constant 0 : index
    %400 = vector.load %arg4[%c96_77, %c0_78] : memref<128x1xf32, #tpu.memory_space<vmem>>, vector<8x1xf32>
    %401 = vector.extract_strided_slice %398 {offsets = [0, 0], sizes = [8, 1], strides = [1, 1]} : vector<8x4xf32> to vector<8x1xf32>
    %402 = vector.extract_strided_slice %0 {offsets = [0, 0], sizes = [1, 128], strides = [1, 1]} : vector<4x128xf32> to vector<1x128xf32>
    %403 = vector.broadcast %401 : vector<8x1xf32> to vector<8x128xf32>
    %404 = vector.broadcast %402 : vector<1x128xf32> to vector<8x128xf32>
    %405 = arith.mulf %403, %404 : vector<8x128xf32>
    %406 = vector.extract_strided_slice %398 {offsets = [0, 1], sizes = [8, 1], strides = [1, 1]} : vector<8x4xf32> to vector<8x1xf32>
    %407 = vector.extract_strided_slice %0 {offsets = [1, 0], sizes = [1, 128], strides = [1, 1]} : vector<4x128xf32> to vector<1x128xf32>
    %408 = vector.broadcast %406 : vector<8x1xf32> to vector<8x128xf32>
    %409 = vector.broadcast %407 : vector<1x128xf32> to vector<8x128xf32>
    %410 = arith.mulf %408, %409 : vector<8x128xf32>
    %411 = arith.addf %405, %410 : vector<8x128xf32>
    %412 = vector.extract_strided_slice %398 {offsets = [0, 2], sizes = [8, 1], strides = [1, 1]} : vector<8x4xf32> to vector<8x1xf32>
    %413 = vector.extract_strided_slice %0 {offsets = [2, 0], sizes = [1, 128], strides = [1, 1]} : vector<4x128xf32> to vector<1x128xf32>
    %414 = vector.broadcast %412 : vector<8x1xf32> to vector<8x128xf32>
    %415 = vector.broadcast %413 : vector<1x128xf32> to vector<8x128xf32>
    %416 = arith.mulf %414, %415 : vector<8x128xf32>
    %417 = arith.addf %411, %416 : vector<8x128xf32>
    %418 = vector.extract_strided_slice %398 {offsets = [0, 3], sizes = [8, 1], strides = [1, 1]} : vector<8x4xf32> to vector<8x1xf32>
    %419 = vector.extract_strided_slice %0 {offsets = [3, 0], sizes = [1, 128], strides = [1, 1]} : vector<4x128xf32> to vector<1x128xf32>
    %420 = vector.broadcast %418 : vector<8x1xf32> to vector<8x128xf32>
    %421 = vector.broadcast %419 : vector<1x128xf32> to vector<8x128xf32>
    %422 = arith.mulf %420, %421 : vector<8x128xf32>
    %423 = arith.addf %417, %422 : vector<8x128xf32>
    %424 = vector.broadcast %399 : vector<8x1xf32> to vector<8x128xf32>
    %425 = arith.addf %423, %424 : vector<8x128xf32>
    %cst_79 = arith.constant 0.000000e+00 : f32
    %426 = vector.broadcast %cst_79 : f32 to vector<8x128xf32>
    %427 = arith.maximumf %425, %426 : vector<8x128xf32>
    %428 = vector.broadcast %400 : vector<8x1xf32> to vector<8x128xf32>
    %429 = arith.mulf %427, %428 : vector<8x128xf32>
    %430 = arith.addf %397, %429 : vector<8x128xf32>
    %c104 = arith.constant 104 : index
    %c0_80 = arith.constant 0 : index
    %431 = vector.load %arg2[%c104, %c0_80] : memref<128x4xf32, #tpu.memory_space<vmem>>, vector<8x4xf32>
    %c104_81 = arith.constant 104 : index
    %c0_82 = arith.constant 0 : index
    %432 = vector.load %arg3[%c104_81, %c0_82] : memref<128x1xf32, #tpu.memory_space<vmem>>, vector<8x1xf32>
    %c104_83 = arith.constant 104 : index
    %c0_84 = arith.constant 0 : index
    %433 = vector.load %arg4[%c104_83, %c0_84] : memref<128x1xf32, #tpu.memory_space<vmem>>, vector<8x1xf32>
    %434 = vector.extract_strided_slice %431 {offsets = [0, 0], sizes = [8, 1], strides = [1, 1]} : vector<8x4xf32> to vector<8x1xf32>
    %435 = vector.extract_strided_slice %0 {offsets = [0, 0], sizes = [1, 128], strides = [1, 1]} : vector<4x128xf32> to vector<1x128xf32>
    %436 = vector.broadcast %434 : vector<8x1xf32> to vector<8x128xf32>
    %437 = vector.broadcast %435 : vector<1x128xf32> to vector<8x128xf32>
    %438 = arith.mulf %436, %437 : vector<8x128xf32>
    %439 = vector.extract_strided_slice %431 {offsets = [0, 1], sizes = [8, 1], strides = [1, 1]} : vector<8x4xf32> to vector<8x1xf32>
    %440 = vector.extract_strided_slice %0 {offsets = [1, 0], sizes = [1, 128], strides = [1, 1]} : vector<4x128xf32> to vector<1x128xf32>
    %441 = vector.broadcast %439 : vector<8x1xf32> to vector<8x128xf32>
    %442 = vector.broadcast %440 : vector<1x128xf32> to vector<8x128xf32>
    %443 = arith.mulf %441, %442 : vector<8x128xf32>
    %444 = arith.addf %438, %443 : vector<8x128xf32>
    %445 = vector.extract_strided_slice %431 {offsets = [0, 2], sizes = [8, 1], strides = [1, 1]} : vector<8x4xf32> to vector<8x1xf32>
    %446 = vector.extract_strided_slice %0 {offsets = [2, 0], sizes = [1, 128], strides = [1, 1]} : vector<4x128xf32> to vector<1x128xf32>
    %447 = vector.broadcast %445 : vector<8x1xf32> to vector<8x128xf32>
    %448 = vector.broadcast %446 : vector<1x128xf32> to vector<8x128xf32>
    %449 = arith.mulf %447, %448 : vector<8x128xf32>
    %450 = arith.addf %444, %449 : vector<8x128xf32>
    %451 = vector.extract_strided_slice %431 {offsets = [0, 3], sizes = [8, 1], strides = [1, 1]} : vector<8x4xf32> to vector<8x1xf32>
    %452 = vector.extract_strided_slice %0 {offsets = [3, 0], sizes = [1, 128], strides = [1, 1]} : vector<4x128xf32> to vector<1x128xf32>
    %453 = vector.broadcast %451 : vector<8x1xf32> to vector<8x128xf32>
    %454 = vector.broadcast %452 : vector<1x128xf32> to vector<8x128xf32>
    %455 = arith.mulf %453, %454 : vector<8x128xf32>
    %456 = arith.addf %450, %455 : vector<8x128xf32>
    %457 = vector.broadcast %432 : vector<8x1xf32> to vector<8x128xf32>
    %458 = arith.addf %456, %457 : vector<8x128xf32>
    %cst_85 = arith.constant 0.000000e+00 : f32
    %459 = vector.broadcast %cst_85 : f32 to vector<8x128xf32>
    %460 = arith.maximumf %458, %459 : vector<8x128xf32>
    %461 = vector.broadcast %433 : vector<8x1xf32> to vector<8x128xf32>
    %462 = arith.mulf %460, %461 : vector<8x128xf32>
    %463 = arith.addf %430, %462 : vector<8x128xf32>
    %c112 = arith.constant 112 : index
    %c0_86 = arith.constant 0 : index
    %464 = vector.load %arg2[%c112, %c0_86] : memref<128x4xf32, #tpu.memory_space<vmem>>, vector<8x4xf32>
    %c112_87 = arith.constant 112 : index
    %c0_88 = arith.constant 0 : index
    %465 = vector.load %arg3[%c112_87, %c0_88] : memref<128x1xf32, #tpu.memory_space<vmem>>, vector<8x1xf32>
    %c112_89 = arith.constant 112 : index
    %c0_90 = arith.constant 0 : index
    %466 = vector.load %arg4[%c112_89, %c0_90] : memref<128x1xf32, #tpu.memory_space<vmem>>, vector<8x1xf32>
    %467 = vector.extract_strided_slice %464 {offsets = [0, 0], sizes = [8, 1], strides = [1, 1]} : vector<8x4xf32> to vector<8x1xf32>
    %468 = vector.extract_strided_slice %0 {offsets = [0, 0], sizes = [1, 128], strides = [1, 1]} : vector<4x128xf32> to vector<1x128xf32>
    %469 = vector.broadcast %467 : vector<8x1xf32> to vector<8x128xf32>
    %470 = vector.broadcast %468 : vector<1x128xf32> to vector<8x128xf32>
    %471 = arith.mulf %469, %470 : vector<8x128xf32>
    %472 = vector.extract_strided_slice %464 {offsets = [0, 1], sizes = [8, 1], strides = [1, 1]} : vector<8x4xf32> to vector<8x1xf32>
    %473 = vector.extract_strided_slice %0 {offsets = [1, 0], sizes = [1, 128], strides = [1, 1]} : vector<4x128xf32> to vector<1x128xf32>
    %474 = vector.broadcast %472 : vector<8x1xf32> to vector<8x128xf32>
    %475 = vector.broadcast %473 : vector<1x128xf32> to vector<8x128xf32>
    %476 = arith.mulf %474, %475 : vector<8x128xf32>
    %477 = arith.addf %471, %476 : vector<8x128xf32>
    %478 = vector.extract_strided_slice %464 {offsets = [0, 2], sizes = [8, 1], strides = [1, 1]} : vector<8x4xf32> to vector<8x1xf32>
    %479 = vector.extract_strided_slice %0 {offsets = [2, 0], sizes = [1, 128], strides = [1, 1]} : vector<4x128xf32> to vector<1x128xf32>
    %480 = vector.broadcast %478 : vector<8x1xf32> to vector<8x128xf32>
    %481 = vector.broadcast %479 : vector<1x128xf32> to vector<8x128xf32>
    %482 = arith.mulf %480, %481 : vector<8x128xf32>
    %483 = arith.addf %477, %482 : vector<8x128xf32>
    %484 = vector.extract_strided_slice %464 {offsets = [0, 3], sizes = [8, 1], strides = [1, 1]} : vector<8x4xf32> to vector<8x1xf32>
    %485 = vector.extract_strided_slice %0 {offsets = [3, 0], sizes = [1, 128], strides = [1, 1]} : vector<4x128xf32> to vector<1x128xf32>
    %486 = vector.broadcast %484 : vector<8x1xf32> to vector<8x128xf32>
    %487 = vector.broadcast %485 : vector<1x128xf32> to vector<8x128xf32>
    %488 = arith.mulf %486, %487 : vector<8x128xf32>
    %489 = arith.addf %483, %488 : vector<8x128xf32>
    %490 = vector.broadcast %465 : vector<8x1xf32> to vector<8x128xf32>
    %491 = arith.addf %489, %490 : vector<8x128xf32>
    %cst_91 = arith.constant 0.000000e+00 : f32
    %492 = vector.broadcast %cst_91 : f32 to vector<8x128xf32>
    %493 = arith.maximumf %491, %492 : vector<8x128xf32>
    %494 = vector.broadcast %466 : vector<8x1xf32> to vector<8x128xf32>
    %495 = arith.mulf %493, %494 : vector<8x128xf32>
    %496 = arith.addf %463, %495 : vector<8x128xf32>
    %c120 = arith.constant 120 : index
    %c0_92 = arith.constant 0 : index
    %497 = vector.load %arg2[%c120, %c0_92] : memref<128x4xf32, #tpu.memory_space<vmem>>, vector<8x4xf32>
    %c120_93 = arith.constant 120 : index
    %c0_94 = arith.constant 0 : index
    %498 = vector.load %arg3[%c120_93, %c0_94] : memref<128x1xf32, #tpu.memory_space<vmem>>, vector<8x1xf32>
    %c120_95 = arith.constant 120 : index
    %c0_96 = arith.constant 0 : index
    %499 = vector.load %arg4[%c120_95, %c0_96] : memref<128x1xf32, #tpu.memory_space<vmem>>, vector<8x1xf32>
    %500 = vector.extract_strided_slice %497 {offsets = [0, 0], sizes = [8, 1], strides = [1, 1]} : vector<8x4xf32> to vector<8x1xf32>
    %501 = vector.extract_strided_slice %0 {offsets = [0, 0], sizes = [1, 128], strides = [1, 1]} : vector<4x128xf32> to vector<1x128xf32>
    %502 = vector.broadcast %500 : vector<8x1xf32> to vector<8x128xf32>
    %503 = vector.broadcast %501 : vector<1x128xf32> to vector<8x128xf32>
    %504 = arith.mulf %502, %503 : vector<8x128xf32>
    %505 = vector.extract_strided_slice %497 {offsets = [0, 1], sizes = [8, 1], strides = [1, 1]} : vector<8x4xf32> to vector<8x1xf32>
    %506 = vector.extract_strided_slice %0 {offsets = [1, 0], sizes = [1, 128], strides = [1, 1]} : vector<4x128xf32> to vector<1x128xf32>
    %507 = vector.broadcast %505 : vector<8x1xf32> to vector<8x128xf32>
    %508 = vector.broadcast %506 : vector<1x128xf32> to vector<8x128xf32>
    %509 = arith.mulf %507, %508 : vector<8x128xf32>
    %510 = arith.addf %504, %509 : vector<8x128xf32>
    %511 = vector.extract_strided_slice %497 {offsets = [0, 2], sizes = [8, 1], strides = [1, 1]} : vector<8x4xf32> to vector<8x1xf32>
    %512 = vector.extract_strided_slice %0 {offsets = [2, 0], sizes = [1, 128], strides = [1, 1]} : vector<4x128xf32> to vector<1x128xf32>
    %513 = vector.broadcast %511 : vector<8x1xf32> to vector<8x128xf32>
    %514 = vector.broadcast %512 : vector<1x128xf32> to vector<8x128xf32>
    %515 = arith.mulf %513, %514 : vector<8x128xf32>
    %516 = arith.addf %510, %515 : vector<8x128xf32>
    %517 = vector.extract_strided_slice %497 {offsets = [0, 3], sizes = [8, 1], strides = [1, 1]} : vector<8x4xf32> to vector<8x1xf32>
    %518 = vector.extract_strided_slice %0 {offsets = [3, 0], sizes = [1, 128], strides = [1, 1]} : vector<4x128xf32> to vector<1x128xf32>
    %519 = vector.broadcast %517 : vector<8x1xf32> to vector<8x128xf32>
    %520 = vector.broadcast %518 : vector<1x128xf32> to vector<8x128xf32>
    %521 = arith.mulf %519, %520 : vector<8x128xf32>
    %522 = arith.addf %516, %521 : vector<8x128xf32>
    %523 = vector.broadcast %498 : vector<8x1xf32> to vector<8x128xf32>
    %524 = arith.addf %522, %523 : vector<8x128xf32>
    %cst_97 = arith.constant 0.000000e+00 : f32
    %525 = vector.broadcast %cst_97 : f32 to vector<8x128xf32>
    %526 = arith.maximumf %524, %525 : vector<8x128xf32>
    %527 = vector.broadcast %499 : vector<8x1xf32> to vector<8x128xf32>
    %528 = arith.mulf %526, %527 : vector<8x128xf32>
    %529 = arith.addf %496, %528 : vector<8x128xf32>
    %cst_98 = arith.constant dense<0.000000e+00> : vector<128xf32>
    %530 = vector.multi_reduction <add>, %529, %cst_98 [0] : vector<8x128xf32> to vector<128xf32>
    %531 = vector.shape_cast %530 : vector<128xf32> to vector<1x128xf32>
    %c0_99 = arith.constant 0 : index
    %c0_100 = arith.constant 0 : index
    %532 = vector.load %arg5[%c0_99, %c0_100] : memref<1x1xf32, #tpu.memory_space<vmem>>, vector<1x1xf32>
    %533 = vector.broadcast %532 : vector<1x1xf32> to vector<1x128xf32>
    %534 = arith.addf %531, %533 : vector<1x128xf32>
    %cst_101 = arith.constant 0.000000e+00 : f32
    %535 = vector.broadcast %cst_101 : f32 to vector<1x128xf32>
    %536 = arith.subf %535, %534 : vector<1x128xf32>
    %537 = math.exp %536 : vector<1x128xf32>
    %cst_102 = arith.constant 1.000000e+00 : f32
    %538 = vector.broadcast %cst_102 : f32 to vector<1x128xf32>
    %539 = arith.addf %538, %537 : vector<1x128xf32>
    %540 = tpu.reciprocal %539 {approx = true} : vector<1x128xf32> -> vector<1x128xf32>
    %cst_103 = arith.constant 0.000000e+00 : f32
    %cst_104 = arith.constant 1.000000e+00 : f32
    %541 = vector.broadcast %cst_103 : f32 to vector<1x128xf32>
    %542 = arith.maximumf %541, %540 : vector<1x128xf32>
    %543 = vector.broadcast %cst_104 : f32 to vector<1x128xf32>
    %544 = arith.minimumf %543, %542 : vector<1x128xf32>
    %cst_105 = arith.constant 1.000000e+00 : f32
    %545 = vector.broadcast %cst_105 : f32 to vector<1x128xf32>
    %546 = arith.subf %545, %544 : vector<1x128xf32>
    %547 = tpu.concatenate %544, %546 in 0 : vector<1x128xf32>, vector<1x128xf32> -> vector<2x128xf32>
    %c0_106 = arith.constant 0 : index
    %c0_107 = arith.constant 0 : index
    %548 = vector.load %arg6[%c0_106, %c0_107] : memref<2x128xf32, #tpu.memory_space<vmem>>, vector<2x128xf32>
    tpu.vector_store %arg6[%c0_106, %c0_107], %547 {strides = array<i32>} : memref<2x128xf32, #tpu.memory_space<vmem>>, vector<2x128xf32>,
    return
  }
  func.func @transform_0(%arg0: i32) -> (i32, i32) {
    %c0_i32 = arith.constant 0 : i32
    %c0_i32_0 = arith.constant 0 : i32
    return %c0_i32, %arg0 : i32, i32
  }
  func.func @transform_1(%arg0: i32) -> (i32, i32) {
    %c0_i32 = arith.constant 0 : i32
    %c0_i32_0 = arith.constant 0 : i32
    %c0_i32_1 = arith.constant 0 : i32
    return %c0_i32, %c0_i32_0 : i32, i32
  }
  func.func @transform_2(%arg0: i32) -> (i32, i32) {
    %c0_i32 = arith.constant 0 : i32
    %c0_i32_0 = arith.constant 0 : i32
    %c0_i32_1 = arith.constant 0 : i32
    return %c0_i32, %c0_i32_0 : i32, i32
  }
  func.func @transform_3(%arg0: i32) -> (i32, i32) {
    %c0_i32 = arith.constant 0 : i32
    %c0_i32_0 = arith.constant 0 : i32
    %c0_i32_1 = arith.constant 0 : i32
    return %c0_i32, %c0_i32_0 : i32, i32
  }
  func.func @transform_4(%arg0: i32) -> (i32, i32) {
    %c0_i32 = arith.constant 0 : i32
    %c0_i32_0 = arith.constant 0 : i32
    %c0_i32_1 = arith.constant 0 : i32
    return %c0_i32, %c0_i32_0 : i32, i32
  }
  func.func @transform_5(%arg0: i32) -> (i32, i32) {
    %c0_i32 = arith.constant 0 : i32
    %c0_i32_0 = arith.constant 0 : i32
    return %c0_i32, %arg0 : i32, i32
  }
}

</mosaic_0001>

<llo_original>
// kernel: neural_network_forward.1
$region0: #{neural_network_forward.1}
  #allocation0 [shape = 'u32[]', space=smem, size = 0x4, offset = 0x4, fixed_abs, tag = 'smem constant byte address 0x4 - core index']
  #allocation1 [shape = 'u32[144,128]{1,0:T(1,128)}', space=vmem, size = 0x12000, scoped, tag = 'internal scratch']
  #allocation2 [shape = 'f32[1,1]{1,0:T(1,128)S(1)}', space=vmem, size = 0x200, scoped, tag = 'scoped memory for neural_network_forward.1']
  %s0 = inlined_call_operand.vmem [shape: f32[4,256], index: 0, kind: input, shape index: {}]
  %s1 = inlined_call_operand.vmem [shape: f32[128,4], index: 1, kind: input, shape index: {}]
  %s2 = inlined_call_operand.vmem [shape: f32[128,1], index: 2, kind: input, shape index: {}]
  %s3 = inlined_call_operand.vmem [shape: f32[128,1], index: 3, kind: input, shape index: {}]
  %s4 = inlined_call_operand.<no memory space> [shape: f32[1,1], index: 4, kind: input, shape index: {}]
  %s5 = inlined_call_operand.hbm [shape: f32[2,256], index: 5, kind: output, shape index: {}]
  %s6 = sld [smem:[#allocation0]]
  $region53: #{neural_network_forward.1} parent=0
    _
  %s8 = ssub.s32 1, %s6
  %s9 = scalar_select 0, %s8, %s6
  %v10 = vstv %s4
  %11 = vst [vmem:[#allocation2] sm:$0x1] %v10
  $region1: #{neural_network_forward.1} parent=0
    #allocation3 [shape = 'u8[2048]{0}', space=vmem, size = 0x800, scoped, tag = 'output window, operand 0']
    #allocation4 [shape = 's32[2]{0}', space=sflag, size = 0x8, scoped, tag = 'scoped memory for neural_network_forward.1']
    %12 = vsyncpa [#allocation4], 0
    %s13 = scalar_lea.sflag [#allocation4], 1
    %14 = vsyncpa %s13, 0
    loop: start=0, step=1, limit=4
    $region2: #{neural_network_forward.1} parent=1 // loop_pre_header
      _
    $region3: #{neural_network_forward.1} parent=1 // loop_header
      %s16 = sphi 0, %s20
      %p17 = scmp.ge.s32.totalorder %s16, 4
      %s26 = sphi 0, %s28
      %s29 = sphi 0, %s26
      %s30 = sphi 0, %s29
      %s46 = sphi 0, %s30
      %s50 = sphi 0, %s50
      %s52 = sphi 0, %s50
      %s53 = sphi 0, %s52
      %s67 = sphi 0, %s53
      %s71 = sphi 0, %s71
      %s73 = sphi 0, %s71
      %s74 = sphi 0, %s73
      %s88 = sphi 0, %s74
      %s92 = sphi 0, %s92
      %s94 = sphi 0, %s92
      %s95 = sphi 0, %s94
      %s109 = sphi 0, %s95
      %s113 = sphi 0, %s113
      %s115 = sphi 0, %s113
      %s116 = sphi 0, %s115
      %s130 = sphi 0, %s116
      %s136 = sphi 0, %s138
      %s139 = sphi 0, %s136
      %s140 = sphi 0, %s139
      %s156 = sphi 0, %s140
    $region4: #{neural_network_forward.1} parent=1 // loop_header_branch
      %19 = sbr.rel (%p17) target = $region8
    $region5: #{neural_network_forward.1} parent=1 // loop_body
      %s21 = ssub.s32 %s16, 1
      %s22 = ssub.s32 %s16, 2
      %s23 = sadd.s32 %s16, 1
      %s24 = ssub.s32 %s16, %s23
      %p25 = scmp.eq.s32.totalorder %s24, 0
      %s27 = sadd.s32 %s26, 1
      %s28 = scalar_select %p25, %s26, %s27
      %p31 = pneg %p25
      %p32 = scmp.eq.s32.totalorder %s16, 1
      %p33 = por %p31, %p32
      %p34 = scmp.ne.s32.totalorder %s26, %s29
      %p35 = scmp.eq.s32.totalorder %s16, 0
      %p36 = por %p34, %p35
      %p37 = scmp.ne.s32.totalorder %s26, %s29
      %p38 = scmp.eq.s32.totalorder %s21, 1
      %p39 = por %p37, %p38
      %p40 = scmp.ne.s32.totalorder %s29, %s30
      %p41 = scmp.eq.s32.totalorder %s21, 0
      %p42 = por %p40, %p41
      %p43 = scmp.ne.s32.totalorder %s29, %s30
      %p44 = scmp.eq.s32.totalorder %s22, 1
      %p45 = por %p43, %p44
      %p47 = scmp.ne.s32.totalorder %s30, %s46
      %p48 = scmp.eq.s32.totalorder %s22, 0
      %p49 = por %p47, %p48
      %s51 = sadd.s32 %s50, 1
      %p54 = scmp.eq.s32.totalorder %s16, 1
      %p55 = scmp.ne.s32.totalorder %s50, %s52
      %p56 = scmp.eq.s32.totalorder %s16, 0
      %p57 = por %p55, %p56
      %p58 = scmp.ne.s32.totalorder %s50, %s52
      %p59 = scmp.eq.s32.totalorder %s21, 1
      %p60 = por %p58, %p59
      %p61 = scmp.ne.s32.totalorder %s52, %s53
      %p62 = scmp.eq.s32.totalorder %s21, 0
      %p63 = por %p61, %p62
      %p64 = scmp.ne.s32.totalorder %s52, %s53
      %p65 = scmp.eq.s32.totalorder %s22, 1
      %p66 = por %p64, %p65
      %p68 = scmp.ne.s32.totalorder %s53, %s67
      %p69 = scmp.eq.s32.totalorder %s22, 0
      %p70 = por %p68, %p69
      %s72 = sadd.s32 %s71, 1
      %p75 = scmp.eq.s32.totalorder %s16, 1
      %p76 = scmp.ne.s32.totalorder %s71, %s73
      %p77 = scmp.eq.s32.totalorder %s16, 0
      %p78 = por %p76, %p77
      %p79 = scmp.ne.s32.totalorder %s71, %s73
      %p80 = scmp.eq.s32.totalorder %s21, 1
      %p81 = por %p79, %p80
      %p82 = scmp.ne.s32.totalorder %s73, %s74
      %p83 = scmp.eq.s32.totalorder %s21, 0
      %p84 = por %p82, %p83
      %p85 = scmp.ne.s32.totalorder %s73, %s74
      %p86 = scmp.eq.s32.totalorder %s22, 1
      %p87 = por %p85, %p86
      %p89 = scmp.ne.s32.totalorder %s74, %s88
      %p90 = scmp.eq.s32.totalorder %s22, 0
      %p91 = por %p89, %p90
      %s93 = sadd.s32 %s92, 1
      %p96 = scmp.eq.s32.totalorder %s16, 1
      %p97 = scmp.ne.s32.totalorder %s92, %s94
      %p98 = scmp.eq.s32.totalorder %s16, 0
      %p99 = por %p97, %p98
      %p100 = scmp.ne.s32.totalorder %s92, %s94
      %p101 = scmp.eq.s32.totalorder %s21, 1
      %p102 = por %p100, %p101
      %p103 = scmp.ne.s32.totalorder %s94, %s95
      %p104 = scmp.eq.s32.totalorder %s21, 0
      %p105 = por %p103, %p104
      %p106 = scmp.ne.s32.totalorder %s94, %s95
      %p107 = scmp.eq.s32.totalorder %s22, 1
      %p108 = por %p106, %p107
      %p110 = scmp.ne.s32.totalorder %s95, %s109
      %p111 = scmp.eq.s32.totalorder %s22, 0
      %p112 = por %p110, %p111
      %s114 = sadd.s32 %s113, 1
      %p117 = scmp.eq.s32.totalorder %s16, 1
      %p118 = scmp.ne.s32.totalorder %s113, %s115
      %p119 = scmp.eq.s32.totalorder %s16, 0
      %p120 = por %p118, %p119
      %p121 = scmp.ne.s32.totalorder %s113, %s115
      %p122 = scmp.eq.s32.totalorder %s21, 1
      %p123 = por %p121, %p122
      %p124 = scmp.ne.s32.totalorder %s115, %s116
      %p125 = scmp.eq.s32.totalorder %s21, 0
      %p126 = por %p124, %p125
      %p127 = scmp.ne.s32.totalorder %s115, %s116
      %p128 = scmp.eq.s32.totalorder %s22, 1
      %p129 = por %p127, %p128
      %p131 = scmp.ne.s32.totalorder %s116, %s130
      %p132 = scmp.eq.s32.totalorder %s22, 0
      %p133 = por %p131, %p132
      %s134 = ssub.s32 %s16, %s23
      %p135 = scmp.eq.s32.totalorder %s134, 0
      %s137 = sadd.s32 %s136, 1
      %s138 = scalar_select %p135, %s136, %s137
      %p141 = pneg %p135
      %p142 = scmp.eq.s32.totalorder %s16, 1
      %p143 = por %p141, %p142
      %p144 = scmp.ne.s32.totalorder %s136, %s139
      %p145 = scmp.eq.s32.totalorder %s16, 0
      %p146 = por %p144, %p145
      %p147 = scmp.ne.s32.totalorder %s136, %s139
      %p148 = scmp.eq.s32.totalorder %s21, 1
      %p149 = por %p147, %p148
      %p150 = scmp.ne.s32.totalorder %s139, %s140
      %p151 = scmp.eq.s32.totalorder %s21, 0
      %p152 = por %p150, %p151
      %p153 = scmp.ne.s32.totalorder %s139, %s140
      %p154 = scmp.eq.s32.totalorder %s22, 1
      %p155 = por %p153, %p154
      %p157 = scmp.ne.s32.totalorder %s140, %s156
      %p158 = scmp.eq.s32.totalorder %s22, 0
      %p159 = por %p157, %p158
      %p160 = scmp.le.s32.totalorder 1, %s16
      %p161 = scmp.lt.s32.totalorder %s16, 3
      %p162 = pnand %p160, %p161
      %p163 = pneg %p162
      // Predicated region
      $region9: #{neural_network_forward.1} parent=5 // pred_check
        _
      $region10: #{neural_network_forward.1} parent=5 // pred_check_branch
        %165 = sbr.rel (%p162) target = $region12
      $region11: #{neural_network_forward.1} parent=5 // pred_region
        %s166 = ssub.s32 %s16, 1
        // Predicated region
        $region13: #{neural_network_forward.1} parent=11 // pred_check
          %p167 = pneg %p63
        $region14: #{neural_network_forward.1} parent=11 // pred_check_branch
          %169 = sbr.rel (%p167) target = $region16
        $region15: #{neural_network_forward.1} parent=11 // pred_region
          _
        $region16: #{neural_network_forward.1} parent=11 // pred_fallthru
          _
        // Predicated region
        $region17: #{neural_network_forward.1} parent=11 // pred_check
          %p170 = pneg %p84
        $region18: #{neural_network_forward.1} parent=11 // pred_check_branch
          %172 = sbr.rel (%p170) target = $region20
        $region19: #{neural_network_forward.1} parent=11 // pred_region
          _
        $region20: #{neural_network_forward.1} parent=11 // pred_fallthru
          _
        // Predicated region
        $region21: #{neural_network_forward.1} parent=11 // pred_check
          %p173 = pneg %p105
        $region22: #{neural_network_forward.1} parent=11 // pred_check_branch
          %175 = sbr.rel (%p173) target = $region24
        $region23: #{neural_network_forward.1} parent=11 // pred_region
          _
        $region24: #{neural_network_forward.1} parent=11 // pred_fallthru
          _
        // Predicated region
        $region25: #{neural_network_forward.1} parent=11 // pred_check
          %p176 = pneg %p126
        $region26: #{neural_network_forward.1} parent=11 // pred_check_branch
          %178 = sbr.rel (%p176) target = $region28
        $region27: #{neural_network_forward.1} parent=11 // pred_region
          _
        $region28: #{neural_network_forward.1} parent=11 // pred_fallthru
          _
      $region12: #{neural_network_forward.1} parent=5 // pred_fallthru
        _
      %p179 = scmp.lt.s32.totalorder %s16, 2
      // Predicated region
      $region29: #{neural_network_forward.1} parent=5 // pred_check
        %p180 = pneg %p179
      $region30: #{neural_network_forward.1} parent=5 // pred_check_branch
        %182 = sbr.rel (%p180) target = $region32
      $region31: #{neural_network_forward.1} parent=5 // pred_region
        // Predicated region
        $region33: #{neural_network_forward.1} parent=31 // pred_check
          %p183 = pneg %p36
        $region34: #{neural_network_forward.1} parent=31 // pred_check_branch
          %185 = sbr.rel (%p183) target = $region36
        $region35: #{neural_network_forward.1} parent=31 // pred_region
          %p186 = scmp.lt.s32.totalorder %s16, 1
          %s187 = scalar_select %p186, %s16, 1
          %s188 = smul.addr %s187, 4
          %s189 = scalar_lea.vmem %s0, %s188
        $region36: #{neural_network_forward.1} parent=31 // pred_fallthru
          _
      $region32: #{neural_network_forward.1} parent=5 // pred_fallthru
        _
      %p190 = scmp.le.s32.totalorder 1, %s16
      %p191 = scmp.lt.s32.totalorder %s16, 3
      %p192 = pnand %p190, %p191
      %p193 = pneg %p192
      // Predicated region
      $region37: #{neural_network_forward.1} parent=5 // pred_check
        _
      $region38: #{neural_network_forward.1} parent=5 // pred_check_branch
        %195 = sbr.rel (%p192) target = $region40
      $region39: #{neural_network_forward.1} parent=5 // pred_region
        %s196 = ssub.s32 %s16, 1
        %p197 = scmp.lt.s32.totalorder %s21, 1
        %s198 = scalar_select %p197, %s21, 1
        %s199 = smul.addr %s198, 4
        %s200 = scalar_lea.vmem %s0, %s199
        %p201 = pneg %p42
        %p202 = pneg %p39
        %p203 = pneg %p63
        %p204 = pneg %p60
        %p205 = pneg %p84
        %p206 = pneg %p81
        %p207 = pneg %p105
        %p208 = pneg %p102
        %p209 = pneg %p126
        %p210 = pneg %p123
        %p211 = pneg %p152
        %p212 = pneg %p149
        %s213 = sand.u32 %s139, 1
        %s214 = scalar_lea.sflag [#allocation4], %s213
        %s215 = sand.u32 %s139, 1
        %s216 = smul.addr %s215, 2
        %s217 = scalar_lea.vmem [#allocation3], %s216
        %p218 = scmp.lt.s32.totalorder %s21, 1
        %s219 = scalar_select %p218, %s21, 1
        %s220 = smul.addr %s219, 4
        %s221 = scalar_lea.vmem %s0, %s220
        %v222 = vld [vmem:[%s221] sm:$0xf]
        %v223 = vld [vmem:[%s1] sm:$0xff]
        %v224 = vld [vmem:[%s2] sm:$0xff]
        %v225 = vld [vmem:[%s3] sm:$0xff]
        %227 = vset.pattern.permute.xlu0 0
        %228 = vperm.xlu0 %227, %v223
        %v229 = vpop.permute.xlu0 %228
        %v231 = vlaneseq
        %v232 = vshrl.u32 %v231, 7
        %v233 = vsub.s32 0, %v232
        %v234 = vrot.slane %v222, %v233
        %v235 = vmul.f32 %v229, %v234
        %236 = vset.pattern.permute.xlu0 1
        %237 = vperm.xlu0 %236, %v223
        %v238 = vpop.permute.xlu0 %237
        %v240 = vlaneseq
        %v241 = vshrl.u32 %v240, 7
        %v242 = vsub.s32 1, %v241
        %v243 = vrot.slane %v222, %v242
        %v244 = vmul.f32 %v238, %v243
        %v245 = vadd.f32 %v235, %v244
        %246 = vset.pattern.permute.xlu0 2
        %247 = vperm.xlu0 %246, %v223
        %v248 = vpop.permute.xlu0 %247
        %v250 = vlaneseq
        %v251 = vshrl.u32 %v250, 7
        %v252 = vsub.s32 2, %v251
        %v253 = vrot.slane %v222, %v252
        %v254 = vmul.f32 %v248, %v253
        %v255 = vadd.f32 %v245, %v254
        %256 = vset.pattern.permute.xlu0 3
        %257 = vperm.xlu0 %256, %v223
        %v258 = vpop.permute.xlu0 %257
        %v260 = vlaneseq
        %v261 = vshrl.u32 %v260, 7
        %v262 = vsub.s32 3, %v261
        %v263 = vrot.slane %v222, %v262
        %v264 = vmul.f32 %v258, %v263
        %v265 = vadd.f32 %v255, %v264
        %267 = vset.pattern.permute.xlu0 0
        %268 = vperm.xlu0 %267, %v224
        %v269 = vpop.permute.xlu0 %268
        %v271 = vadd.f32 %v265, %v269
        %v272 = vmax.f32 %v271, 0.0
        %274 = vset.pattern.permute.xlu0 0
        %275 = vperm.xlu0 %274, %v225
        %v276 = vpop.permute.xlu0 %275
        %v278 = vmul.f32 %v272, %v276
        %v279 = vadd.f32 %v278, 0.0
        %v280 = vld [vmem:[%s1 + $0x8] sm:$0xff]
        %v281 = vld [vmem:[%s2 + $0x8] sm:$0xff]
        %v282 = vld [vmem:[%s3 + $0x8] sm:$0xff]
        %284 = vset.pattern.permute.xlu0 0
        %285 = vperm.xlu0 %284, %v280
        %v286 = vpop.permute.xlu0 %285
        %v288 = vmul.f32 %v286, %v234
        %289 = vset.pattern.permute.xlu0 1
        %290 = vperm.xlu0 %289, %v280
        %v291 = vpop.permute.xlu0 %290
        %v293 = vmul.f32 %v291, %v243
        %v294 = vadd.f32 %v288, %v293
        %295 = vset.pattern.permute.xlu0 2
        %296 = vperm.xlu0 %295, %v280
        %v297 = vpop.permute.xlu0 %296
        %v299 = vmul.f32 %v297, %v253
        %v300 = vadd.f32 %v294, %v299
        %301 = vset.pattern.permute.xlu0 3
        %302 = vperm.xlu0 %301, %v280
        %v303 = vpop.permute.xlu0 %302
        %v305 = vmul.f32 %v303, %v263
        %v306 = vadd.f32 %v300, %v305
        %308 = vset.pattern.permute.xlu0 0
        %309 = vperm.xlu0 %308, %v281
        %v310 = vpop.permute.xlu0 %309
        %v312 = vadd.f32 %v306, %v310
        %v313 = vmax.f32 %v312, 0.0
        %315 = vset.pattern.permute.xlu0 0
        %316 = vperm.xlu0 %315, %v282
        %v317 = vpop.permute.xlu0 %316
        %v319 = vmul.f32 %v313, %v317
        %v320 = vadd.f32 %v279, %v319
        %v321 = vld [vmem:[%s1 + $0x10] sm:$0xff]
        %v322 = vld [vmem:[%s2 + $0x10] sm:$0xff]
        %v323 = vld [vmem:[%s3 + $0x10] sm:$0xff]
        %325 = vset.pattern.permute.xlu0 0
        %326 = vperm.xlu0 %325, %v321
        %v327 = vpop.permute.xlu0 %326
        %v329 = vmul.f32 %v327, %v234
        %330 = vset.pattern.permute.xlu0 1
        %331 = vperm.xlu0 %330, %v321
        %v332 = vpop.permute.xlu0 %331
        %v334 = vmul.f32 %v332, %v243
        %v335 = vadd.f32 %v329, %v334
        %336 = vset.pattern.permute.xlu0 2
        %337 = vperm.xlu0 %336, %v321
        %v338 = vpop.permute.xlu0 %337
        %v340 = vmul.f32 %v338, %v253
        %v341 = vadd.f32 %v335, %v340
        %342 = vset.pattern.permute.xlu0 3
        %343 = vperm.xlu0 %342, %v321
        %v344 = vpop.permute.xlu0 %343
        %v346 = vmul.f32 %v344, %v263
        %v347 = vadd.f32 %v341, %v346
        %349 = vset.pattern.permute.xlu0 0
        %350 = vperm.xlu0 %349, %v322
        %v351 = vpop.permute.xlu0 %350
        %v353 = vadd.f32 %v347, %v351
        %v354 = vmax.f32 %v353, 0.0
        %356 = vset.pattern.permute.xlu0 0
        %357 = vperm.xlu0 %356, %v323
        %v358 = vpop.permute.xlu0 %357
        %v360 = vmul.f32 %v354, %v358
        %v361 = vadd.f32 %v320, %v360
        %v362 = vld [vmem:[%s1 + $0x18] sm:$0xff]
        %v363 = vld [vmem:[%s2 + $0x18] sm:$0xff]
        %v364 = vld [vmem:[%s3 + $0x18] sm:$0xff]
        %366 = vset.pattern.permute.xlu0 0
        %367 = vperm.xlu0 %366, %v362
        %v368 = vpop.permute.xlu0 %367
        %v370 = vmul.f32 %v368, %v234
        %371 = vset.pattern.permute.xlu0 1
        %372 = vperm.xlu0 %371, %v362
        %v373 = vpop.permute.xlu0 %372
        %v375 = vmul.f32 %v373, %v243
        %v376 = vadd.f32 %v370, %v375
        %377 = vset.pattern.permute.xlu0 2
        %378 = vperm.xlu0 %377, %v362
        %v379 = vpop.permute.xlu0 %378
        %v381 = vmul.f32 %v379, %v253
        %v382 = vadd.f32 %v376, %v381
        %383 = vset.pattern.permute.xlu0 3
        %384 = vperm.xlu0 %383, %v362
        %v385 = vpop.permute.xlu0 %384
        %v387 = vmul.f32 %v385, %v263
        %v388 = vadd.f32 %v382, %v387
        %390 = vset.pattern.permute.xlu0 0
        %391 = vperm.xlu0 %390, %v363
        %v392 = vpop.permute.xlu0 %391
        %v394 = vadd.f32 %v388, %v392
        %v395 = vmax.f32 %v394, 0.0
        %397 = vset.pattern.permute.xlu0 0
        %398 = vperm.xlu0 %397, %v364
        %v399 = vpop.permute.xlu0 %398
        %v401 = vmul.f32 %v395, %v399
        %v402 = vadd.f32 %v361, %v401
        %v403 = vld [vmem:[%s1 + $0x20] sm:$0xff]
        %v404 = vld [vmem:[%s2 + $0x20] sm:$0xff]
        %v405 = vld [vmem:[%s3 + $0x20] sm:$0xff]
        %407 = vset.pattern.permute.xlu0 0
        %408 = vperm.xlu0 %407, %v403
        %v409 = vpop.permute.xlu0 %408
        %v411 = vmul.f32 %v409, %v234
        %412 = vset.pattern.permute.xlu0 1
        %413 = vperm.xlu0 %412, %v403
        %v414 = vpop.permute.xlu0 %413
        %v416 = vmul.f32 %v414, %v243
        %v417 = vadd.f32 %v411, %v416
        %418 = vset.pattern.permute.xlu0 2
        %419 = vperm.xlu0 %418, %v403
        %v420 = vpop.permute.xlu0 %419
        %v422 = vmul.f32 %v420, %v253
        %v423 = vadd.f32 %v417, %v422
        %424 = vset.pattern.permute.xlu0 3
        %425 = vperm.xlu0 %424, %v403
        %v426 = vpop.permute.xlu0 %425
        %v428 = vmul.f32 %v426, %v263
        %v429 = vadd.f32 %v423, %v428
        %431 = vset.pattern.permute.xlu0 0
        %432 = vperm.xlu0 %431, %v404
        %v433 = vpop.permute.xlu0 %432
        %v435 = vadd.f32 %v429, %v433
        %v436 = vmax.f32 %v435, 0.0
        %438 = vset.pattern.permute.xlu0 0
        %439 = vperm.xlu0 %438, %v405
        %v440 = vpop.permute.xlu0 %439
        %v442 = vmul.f32 %v436, %v440
        %v443 = vadd.f32 %v402, %v442
        %v444 = vld [vmem:[%s1 + $0x28] sm:$0xff]
        %v445 = vld [vmem:[%s2 + $0x28] sm:$0xff]
        %v446 = vld [vmem:[%s3 + $0x28] sm:$0xff]
        %448 = vset.pattern.permute.xlu0 0
        %449 = vperm.xlu0 %448, %v444
        %v450 = vpop.permute.xlu0 %449
        %v452 = vmul.f32 %v450, %v234
        %453 = vset.pattern.permute.xlu0 1
        %454 = vperm.xlu0 %453, %v444
        %v455 = vpop.permute.xlu0 %454
        %v457 = vmul.f32 %v455, %v243
        %v458 = vadd.f32 %v452, %v457
        %459 = vset.pattern.permute.xlu0 2
        %460 = vperm.xlu0 %459, %v444
        %v461 = vpop.permute.xlu0 %460
        %v463 = vmul.f32 %v461, %v253
        %v464 = vadd.f32 %v458, %v463
        %465 = vset.pattern.permute.xlu0 3
        %466 = vperm.xlu0 %465, %v444
        %v467 = vpop.permute.xlu0 %466
        %v469 = vmul.f32 %v467, %v263
        %v470 = vadd.f32 %v464, %v469
        %472 = vset.pattern.permute.xlu0 0
        %473 = vperm.xlu0 %472, %v445
        %v474 = vpop.permute.xlu0 %473
        %v476 = vadd.f32 %v470, %v474
        %v477 = vmax.f32 %v476, 0.0
        %479 = vset.pattern.permute.xlu0 0
        %480 = vperm.xlu0 %479, %v446
        %v481 = vpop.permute.xlu0 %480
        %v483 = vmul.f32 %v477, %v481
        %v484 = vadd.f32 %v443, %v483
        %v485 = vld [vmem:[%s1 + $0x30] sm:$0xff]
        %v486 = vld [vmem:[%s2 + $0x30] sm:$0xff]
        %v487 = vld [vmem:[%s3 + $0x30] sm:$0xff]
        %489 = vset.pattern.permute.xlu0 0
        %490 = vperm.xlu0 %489, %v485
        %v491 = vpop.permute.xlu0 %490
        %v493 = vmul.f32 %v491, %v234
        %494 = vset.pattern.permute.xlu0 1
        %495 = vperm.xlu0 %494, %v485
        %v496 = vpop.permute.xlu0 %495
        %v498 = vmul.f32 %v496, %v243
        %v499 = vadd.f32 %v493, %v498
        %500 = vset.pattern.permute.xlu0 2
        %501 = vperm.xlu0 %500, %v485
        %v502 = vpop.permute.xlu0 %501
        %v504 = vmul.f32 %v502, %v253
        %v505 = vadd.f32 %v499, %v504
        %506 = vset.pattern.permute.xlu0 3
        %507 = vperm.xlu0 %506, %v485
        %v508 = vpop.permute.xlu0 %507
        %v510 = vmul.f32 %v508, %v263
        %v511 = vadd.f32 %v505, %v510
        %513 = vset.pattern.permute.xlu0 0
        %514 = vperm.xlu0 %513, %v486
        %v515 = vpop.permute.xlu0 %514
        %v517 = vadd.f32 %v511, %v515
        %v518 = vmax.f32 %v517, 0.0
        %520 = vset.pattern.permute.xlu0 0
        %521 = vperm.xlu0 %520, %v487
        %v522 = vpop.permute.xlu0 %521
        %v524 = vmul.f32 %v518, %v522
        %v525 = vadd.f32 %v484, %v524
        %v526 = vld [vmem:[%s1 + $0x38] sm:$0xff]
        %v527 = vld [vmem:[%s2 + $0x38] sm:$0xff]
        %v528 = vld [vmem:[%s3 + $0x38] sm:$0xff]
        %530 = vset.pattern.permute.xlu0 0
        %531 = vperm.xlu0 %530, %v526
        %v532 = vpop.permute.xlu0 %531
        %v534 = vmul.f32 %v532, %v234
        %535 = vset.pattern.permute.xlu0 1
        %536 = vperm.xlu0 %535, %v526
        %v537 = vpop.permute.xlu0 %536
        %v539 = vmul.f32 %v537, %v243
        %v540 = vadd.f32 %v534, %v539
        %541 = vset.pattern.permute.xlu0 2
        %542 = vperm.xlu0 %541, %v526
        %v543 = vpop.permute.xlu0 %542
        %v545 = vmul.f32 %v543, %v253
        %v546 = vadd.f32 %v540, %v545
        %547 = vset.pattern.permute.xlu0 3
        %548 = vperm.xlu0 %547, %v526
        %v549 = vpop.permute.xlu0 %548
        %v551 = vmul.f32 %v549, %v263
        %v552 = vadd.f32 %v546, %v551
        %554 = vset.pattern.permute.xlu0 0
        %555 = vperm.xlu0 %554, %v527
        %v556 = vpop.permute.xlu0 %555
        %v558 = vadd.f32 %v552, %v556
        %v559 = vmax.f32 %v558, 0.0
        %561 = vset.pattern.permute.xlu0 0
        %562 = vperm.xlu0 %561, %v528
        %v563 = vpop.permute.xlu0 %562
        %v565 = vmul.f32 %v559, %v563
        %v566 = vadd.f32 %v525, %v565
        %v567 = vld [vmem:[%s1 + $0x40] sm:$0xff]
        %v568 = vld [vmem:[%s2 + $0x40] sm:$0xff]
        %v569 = vld [vmem:[%s3 + $0x40] sm:$0xff]
        %571 = vset.pattern.permute.xlu0 0
        %572 = vperm.xlu0 %571, %v567
        %v573 = vpop.permute.xlu0 %572
        %v575 = vmul.f32 %v573, %v234
        %576 = vset.pattern.permute.xlu0 1
        %577 = vperm.xlu0 %576, %v567
        %v578 = vpop.permute.xlu0 %577
        %v580 = vmul.f32 %v578, %v243
        %v581 = vadd.f32 %v575, %v580
        %582 = vset.pattern.permute.xlu0 2
        %583 = vperm.xlu0 %582, %v567
        %v584 = vpop.permute.xlu0 %583
        %v586 = vmul.f32 %v584, %v253
        %v587 = vadd.f32 %v581, %v586
        %588 = vset.pattern.permute.xlu0 3
        %589 = vperm.xlu0 %588, %v567
        %v590 = vpop.permute.xlu0 %589
        %v592 = vmul.f32 %v590, %v263
        %v593 = vadd.f32 %v587, %v592
        %595 = vset.pattern.permute.xlu0 0
        %596 = vperm.xlu0 %595, %v568
        %v597 = vpop.permute.xlu0 %596
        %v599 = vadd.f32 %v593, %v597
        %v600 = vmax.f32 %v599, 0.0
        %602 = vset.pattern.permute.xlu0 0
        %603 = vperm.xlu0 %602, %v569
        %v604 = vpop.permute.xlu0 %603
        %v606 = vmul.f32 %v600, %v604
        %v607 = vadd.f32 %v566, %v606
        %v608 = vld [vmem:[%s1 + $0x48] sm:$0xff]
        %v609 = vld [vmem:[%s2 + $0x48] sm:$0xff]
        %v610 = vld [vmem:[%s3 + $0x48] sm:$0xff]
        %612 = vset.pattern.permute.xlu0 0
        %613 = vperm.xlu0 %612, %v608
        %v614 = vpop.permute.xlu0 %613
        %v616 = vmul.f32 %v614, %v234
        %617 = vset.pattern.permute.xlu0 1
        %618 = vperm.xlu0 %617, %v608
        %v619 = vpop.permute.xlu0 %618
        %v621 = vmul.f32 %v619, %v243
        %v622 = vadd.f32 %v616, %v621
        %623 = vset.pattern.permute.xlu0 2
        %624 = vperm.xlu0 %623, %v608
        %v625 = vpop.permute.xlu0 %624
        %v627 = vmul.f32 %v625, %v253
        %v628 = vadd.f32 %v622, %v627
        %629 = vset.pattern.permute.xlu0 3
        %630 = vperm.xlu0 %629, %v608
        %v631 = vpop.permute.xlu0 %630
        %v633 = vmul.f32 %v631, %v263
        %v634 = vadd.f32 %v628, %v633
        %636 = vset.pattern.permute.xlu0 0
        %637 = vperm.xlu0 %636, %v609
        %v638 = vpop.permute.xlu0 %637
        %v640 = vadd.f32 %v634, %v638
        %v641 = vmax.f32 %v640, 0.0
        %643 = vset.pattern.permute.xlu0 0
        %644 = vperm.xlu0 %643, %v610
        %v645 = vpop.permute.xlu0 %644
        %v647 = vmul.f32 %v641, %v645
        %v648 = vadd.f32 %v607, %v647
        %v649 = vld [vmem:[%s1 + $0x50] sm:$0xff]
        %v650 = vld [vmem:[%s2 + $0x50] sm:$0xff]
        %v651 = vld [vmem:[%s3 + $0x50] sm:$0xff]
        %653 = vset.pattern.permute.xlu0 0
        %654 = vperm.xlu0 %653, %v649
        %v655 = vpop.permute.xlu0 %654
        %v657 = vmul.f32 %v655, %v234
        %658 = vset.pattern.permute.xlu0 1
        %659 = vperm.xlu0 %658, %v649
        %v660 = vpop.permute.xlu0 %659
        %v662 = vmul.f32 %v660, %v243
        %v663 = vadd.f32 %v657, %v662
        %664 = vset.pattern.permute.xlu0 2
        %665 = vperm.xlu0 %664, %v649
        %v666 = vpop.permute.xlu0 %665
        %v668 = vmul.f32 %v666, %v253
        %v669 = vadd.f32 %v663, %v668
        %670 = vset.pattern.permute.xlu0 3
        %671 = vperm.xlu0 %670, %v649
        %v672 = vpop.permute.xlu0 %671
        %v674 = vmul.f32 %v672, %v263
        %v675 = vadd.f32 %v669, %v674
        %677 = vset.pattern.permute.xlu0 0
        %678 = vperm.xlu0 %677, %v650
        %v679 = vpop.permute.xlu0 %678
        %v681 = vadd.f32 %v675, %v679
        %v682 = vmax.f32 %v681, 0.0
        %684 = vset.pattern.permute.xlu0 0
        %685 = vperm.xlu0 %684, %v651
        %v686 = vpop.permute.xlu0 %685
        %v688 = vmul.f32 %v682, %v686
        %v689 = vadd.f32 %v648, %v688
        %v690 = vld [vmem:[%s1 + $0x58] sm:$0xff]
        %v691 = vld [vmem:[%s2 + $0x58] sm:$0xff]
        %v692 = vld [vmem:[%s3 + $0x58] sm:$0xff]
        %694 = vset.pattern.permute.xlu0 0
        %695 = vperm.xlu0 %694, %v690
        %v696 = vpop.permute.xlu0 %695
        %v698 = vmul.f32 %v696, %v234
        %699 = vset.pattern.permute.xlu0 1
        %700 = vperm.xlu0 %699, %v690
        %v701 = vpop.permute.xlu0 %700
        %v703 = vmul.f32 %v701, %v243
        %v704 = vadd.f32 %v698, %v703
        %705 = vset.pattern.permute.xlu0 2
        %706 = vperm.xlu0 %705, %v690
        %v707 = vpop.permute.xlu0 %706
        %v709 = vmul.f32 %v707, %v253
        %v710 = vadd.f32 %v704, %v709
        %711 = vset.pattern.permute.xlu0 3
        %712 = vperm.xlu0 %711, %v690
        %v713 = vpop.permute.xlu0 %712
        %v715 = vmul.f32 %v713, %v263
        %v716 = vadd.f32 %v710, %v715
        %718 = vset.pattern.permute.xlu0 0
        %719 = vperm.xlu0 %718, %v691
        %v720 = vpop.permute.xlu0 %719
        %v722 = vadd.f32 %v716, %v720
        %v723 = vmax.f32 %v722, 0.0
        %725 = vset.pattern.permute.xlu0 0
        %726 = vperm.xlu0 %725, %v692
        %v727 = vpop.permute.xlu0 %726
        %v729 = vmul.f32 %v723, %v727
        %v730 = vadd.f32 %v689, %v729
        %v731 = vld [vmem:[%s1 + $0x60] sm:$0xff]
        %v732 = vld [vmem:[%s2 + $0x60] sm:$0xff]
        %v733 = vld [vmem:[%s3 + $0x60] sm:$0xff]
        %735 = vset.pattern.permute.xlu0 0
        %736 = vperm.xlu0 %735, %v731
        %v737 = vpop.permute.xlu0 %736
        %v739 = vmul.f32 %v737, %v234
        %740 = vset.pattern.permute.xlu0 1
        %741 = vperm.xlu0 %740, %v731
        %v742 = vpop.permute.xlu0 %741
        %v744 = vmul.f32 %v742, %v243
        %v745 = vadd.f32 %v739, %v744
        %746 = vset.pattern.permute.xlu0 2
        %747 = vperm.xlu0 %746, %v731
        %v748 = vpop.permute.xlu0 %747
        %v750 = vmul.f32 %v748, %v253
        %v751 = vadd.f32 %v745, %v750
        %752 = vset.pattern.permute.xlu0 3
        %753 = vperm.xlu0 %752, %v731
        %v754 = vpop.permute.xlu0 %753
        %v756 = vmul.f32 %v754, %v263
        %v757 = vadd.f32 %v751, %v756
        %759 = vset.pattern.permute.xlu0 0
        %760 = vperm.xlu0 %759, %v732
        %v761 = vpop.permute.xlu0 %760
        %v763 = vadd.f32 %v757, %v761
        %v764 = vmax.f32 %v763, 0.0
        %766 = vset.pattern.permute.xlu0 0
        %767 = vperm.xlu0 %766, %v733
        %v768 = vpop.permute.xlu0 %767
        %v770 = vmul.f32 %v764, %v768
        %v771 = vadd.f32 %v730, %v770
        %v772 = vld [vmem:[%s1 + $0x68] sm:$0xff]
        %v773 = vld [vmem:[%s2 + $0x68] sm:$0xff]
        %v774 = vld [vmem:[%s3 + $0x68] sm:$0xff]
        %776 = vset.pattern.permute.xlu0 0
        %777 = vperm.xlu0 %776, %v772
        %v778 = vpop.permute.xlu0 %777
        %v780 = vmul.f32 %v778, %v234
        %781 = vset.pattern.permute.xlu0 1
        %782 = vperm.xlu0 %781, %v772
        %v783 = vpop.permute.xlu0 %782
        %v785 = vmul.f32 %v783, %v243
        %v786 = vadd.f32 %v780, %v785
        %787 = vset.pattern.permute.xlu0 2
        %788 = vperm.xlu0 %787, %v772
        %v789 = vpop.permute.xlu0 %788
        %v791 = vmul.f32 %v789, %v253
        %v792 = vadd.f32 %v786, %v791
        %793 = vset.pattern.permute.xlu0 3
        %794 = vperm.xlu0 %793, %v772
        %v795 = vpop.permute.xlu0 %794
        %v797 = vmul.f32 %v795, %v263
        %v798 = vadd.f32 %v792, %v797
        %800 = vset.pattern.permute.xlu0 0
        %801 = vperm.xlu0 %800, %v773
        %v802 = vpop.permute.xlu0 %801
        %v804 = vadd.f32 %v798, %v802
        %v805 = vmax.f32 %v804, 0.0
        %807 = vset.pattern.permute.xlu0 0
        %808 = vperm.xlu0 %807, %v774
        %v809 = vpop.permute.xlu0 %808
        %v811 = vmul.f32 %v805, %v809
        %v812 = vadd.f32 %v771, %v811
        %v813 = vld [vmem:[%s1 + $0x70] sm:$0xff]
        %v814 = vld [vmem:[%s2 + $0x70] sm:$0xff]
        %v815 = vld [vmem:[%s3 + $0x70] sm:$0xff]
        %817 = vset.pattern.permute.xlu0 0
        %818 = vperm.xlu0 %817, %v813
        %v819 = vpop.permute.xlu0 %818
        %v821 = vmul.f32 %v819, %v234
        %822 = vset.pattern.permute.xlu0 1
        %823 = vperm.xlu0 %822, %v813
        %v824 = vpop.permute.xlu0 %823
        %v826 = vmul.f32 %v824, %v243
        %v827 = vadd.f32 %v821, %v826
        %828 = vset.pattern.permute.xlu0 2
        %829 = vperm.xlu0 %828, %v813
        %v830 = vpop.permute.xlu0 %829
        %v832 = vmul.f32 %v830, %v253
        %v833 = vadd.f32 %v827, %v832
        %834 = vset.pattern.permute.xlu0 3
        %835 = vperm.xlu0 %834, %v813
        %v836 = vpop.permute.xlu0 %835
        %v838 = vmul.f32 %v836, %v263
        %v839 = vadd.f32 %v833, %v838
        %841 = vset.pattern.permute.xlu0 0
        %842 = vperm.xlu0 %841, %v814
        %v843 = vpop.permute.xlu0 %842
        %v845 = vadd.f32 %v839, %v843
        %v846 = vmax.f32 %v845, 0.0
        %848 = vset.pattern.permute.xlu0 0
        %849 = vperm.xlu0 %848, %v815
        %v850 = vpop.permute.xlu0 %849
        %v852 = vmul.f32 %v846, %v850
        %v853 = vadd.f32 %v812, %v852
        %v854 = vld [vmem:[%s1 + $0x78] sm:$0xff]
        %v855 = vld [vmem:[%s2 + $0x78] sm:$0xff]
        %v856 = vld [vmem:[%s3 + $0x78] sm:$0xff]
        %858 = vset.pattern.permute.xlu0 0
        %859 = vperm.xlu0 %858, %v854
        %v860 = vpop.permute.xlu0 %859
        %v862 = vmul.f32 %v860, %v234
        %863 = vset.pattern.permute.xlu0 1
        %864 = vperm.xlu0 %863, %v854
        %v865 = vpop.permute.xlu0 %864
        %v867 = vmul.f32 %v865, %v243
        %v868 = vadd.f32 %v862, %v867
        %869 = vset.pattern.permute.xlu0 2
        %870 = vperm.xlu0 %869, %v854
        %v871 = vpop.permute.xlu0 %870
        %v873 = vmul.f32 %v871, %v253
        %v874 = vadd.f32 %v868, %v873
        %875 = vset.pattern.permute.xlu0 3
        %876 = vperm.xlu0 %875, %v854
        %v877 = vpop.permute.xlu0 %876
        %v879 = vmul.f32 %v877, %v263
        %v880 = vadd.f32 %v874, %v879
        %882 = vset.pattern.permute.xlu0 0
        %883 = vperm.xlu0 %882, %v855
        %v884 = vpop.permute.xlu0 %883
        %v886 = vadd.f32 %v880, %v884
        %v887 = vmax.f32 %v886, 0.0
        %889 = vset.pattern.permute.xlu0 0
        %890 = vperm.xlu0 %889, %v856
        %v891 = vpop.permute.xlu0 %890
        %v893 = vmul.f32 %v887, %v891
        %v894 = vadd.f32 %v853, %v893
        %v895 = vrot.slane %v894, 4
        %v896 = vadd.f32 %v894, %v895
        %v897 = vrot.slane %v896, 2
        %v898 = vadd.f32 %v896, %v897
        %v899 = vrot.slane %v898, 1
        %v900 = vadd.f32 %v898, %v899
        %v901 = vld [vmem:[#allocation2] sm:$0x1]
        %903 = vset.pattern.permute.xlu0 0
        %904 = vperm.xlu0 %903, %v901
        %v905 = vpop.permute.xlu0 %904
        %v907 = vlaneseq
        %v908 = vshrl.u32 %v907, 7
        %v909 = vsub.s32 0, %v908
        %v910 = vrot.slane %v905, %v909
        %v911 = vadd.f32 %v900, %v910
        %v912 = vsub.f32 0.0, %v911
        %v913 = vmul.f32 %v912, 1.442695
        %v914 = vpow.pop %v913
        %v915 = vadd.f32 %v914, 1.0
        %v916 = vrcp.pop %v915
        %v917 = vmax.f32 %v916, 0.0
        %v918 = vmin.f32 %v917, 1.0
        %v919 = vsub.f32 1.0, %v918
        %vm920 = vcmask 1040384
        %v921 = vsel %vm920, %v918, %v919
        %922 = vst [vmem:[%s217] sm:$0x3] %v921
        %s923 = sand.u32 %s139, 1
        %s924 = scalar_lea.sflag [#allocation4], %s923
        %s925 = sand.u32 %s139, 1
        %s926 = smul.addr %s925, 2
        %s927 = scalar_lea.vmem [#allocation3], %s926
        // Predicated region
        $region41: #{neural_network_forward.1} parent=39 // pred_check
          %p928 = pneg %p149
        $region42: #{neural_network_forward.1} parent=39 // pred_check_branch
          %930 = sbr.rel (%p928) target = $region44
        $region43: #{neural_network_forward.1} parent=39 // pred_region
          %s932 = ssub.s32 32, 32
          %933 = vsyncadd %s924, %s932
          %s934 = smul.addr %s21, 32
          %s935 = scalar_lea.hbm %s5, %s934
          %s937 = sshll.u32 %s927, 4
          %s938 = int_to_ptr.vmem [resolvable:$true] %s937
          %940 = dma.vmem_to_hbm [thread:$0]  %s938, 32, %s935, %s924
        $region44: #{neural_network_forward.1} parent=39 // pred_fallthru
          _
      $region40: #{neural_network_forward.1} parent=5 // pred_fallthru
        _
      %p941 = scmp.le.s32.totalorder 2, %s16
      // Predicated region
      $region45: #{neural_network_forward.1} parent=5 // pred_check
        %p942 = pneg %p941
      $region46: #{neural_network_forward.1} parent=5 // pred_check_branch
        %944 = sbr.rel (%p942) target = $region48
      $region47: #{neural_network_forward.1} parent=5 // pred_region
        %s945 = ssub.s32 %s16, 2
        // Predicated region
        $region49: #{neural_network_forward.1} parent=47 // pred_check
          %p946 = pneg %p155
        $region50: #{neural_network_forward.1} parent=47 // pred_check_branch
          %948 = sbr.rel (%p946) target = $region52
        $region51: #{neural_network_forward.1} parent=47 // pred_region
          %s949 = sand.u32 %s140, 1
          %s950 = scalar_lea.sflag [#allocation4], %s949
          %s951 = sand.u32 %s140, 1
          %s952 = smul.addr %s951, 2
          %s953 = scalar_lea.vmem [#allocation3], %s952
          %954 = dma.done %s950, 32
        $region52: #{neural_network_forward.1} parent=47 // pred_fallthru
          _
      $region48: #{neural_network_forward.1} parent=5 // pred_fallthru
        _
    $region6: #{neural_network_forward.1} parent=1 // loop_footer
      %s20 = sadd.s32 1, %s16
    $region7: #{neural_network_forward.1} parent=1 // loop_footer_branch
      %15 = sbr.rel target = $region3
    $region8: #{neural_network_forward.1} parent=1 // loop_exit
      _
    %955 = vsyncpa [#allocation4], 1
    %s956 = scalar_lea.sflag [#allocation4], 1
    %957 = vsyncpa %s956, 1

</llo_original>
